<compile_context>
chip_gen: v5e
topology: v5e:2x2
jax: 0.10.0
libtpu: 0.0.40
codegen_flags: <defaults>
</compile_context>

<pallas_src>
import jax
import jax.numpy as jnp
import numpy as np
from jax import lax
from jax.experimental import pallas as pl
from jax.experimental.pallas import tpu as pltpu


# ----------------------------- Pallas kernels ------------------------------ #

def conv_relu_pool_kernel(x_ref, w_ref, b_ref, o_ref):
    """Fused conv(5x5, pad=2) + ReLU + maxpool(2x2) for one batch chunk.

    x_ref: (Bt, 4, Np, K)   im2col patches; axis 1 = offset inside 2x2 window
    w_ref: (K, Cout)        conv weights reshaped to a matmul operand
    b_ref: (1, 1, Cout)     bias
    o_ref: (Bt, Np, Cout)   pooled output, Np = 8-padded (H/2)*(W/2)
    """
    Bt, G, Np, K = x_ref.shape
    Cout = w_ref.shape[-1]

    # One big MXU matmul (M = Bt*4*Np) instead of four small ones.
    # Leading-dim merge only -> no lane/sublane relayout (Np is 8-aligned).
    x = x_ref[...].reshape(Bt * G * Np, K)
    z = jnp.dot(x, w_ref[...], preferred_element_type=jnp.float32)
    z = z.reshape(Bt, G, Np, Cout)

    # Max over the 4 pool offsets, then a single bias-add + ReLU
    # (relu(max_i(z_i) + b) == max_i(relu(z_i + b)) since b is constant).
    pooled = jnp.max(z, axis=1)                       # (Bt, Np, Cout)
    o_ref[...] = jnp.maximum(pooled + b_ref[...], 0.0)


def linear_kernel(x_ref, w_ref, b_ref, o_ref):
    """o = x @ w + b;  x:(B,F), w:(F,O), b:(1,O), o:(B,O)."""
    o_ref[...] = jnp.dot(x_ref[...], w_ref[...],
                         preferred_element_type=jnp.float32) + b_ref[...]


# ------------------------------ JAX glue ----------------------------------- #

def _pick_bt(B, cap=8):
    """Largest batch-chunk <= cap that divides B while keeping >= 2 grid steps."""
    target = max(1, min(cap, B // 2 if B > 1 else 1))
    for bt in range(target, 0, -1):
        if B % bt == 0:
            return bt
    return 1


def _im2col_pool_layout(x_nhwc, ksize=5, pad=2):
    """(B,H,W,C) -> (B, 4, Np, K) im2col patches grouped by 2x2-pool offset.

    Np = (H/2)*(W/2) rounded up to a multiple of 8 (zero-padded rows),
    K  = ksize*ksize*C with (kh, kw, cin) ordering (matches PyTorch weights).
    """
    B, H, W, C = x_nhwc.shape
    xp = jnp.pad(x_nhwc, ((0, 0), (pad, pad), (pad, pad), (0, 0)))
    cols = []
    for kh in range(ksize):
        for kw in range(ksize):
            cols.append(xp[:, kh:kh + H, kw:kw + W, :])
    p = jnp.stack(cols, axis=3)                       # (B, H, W, 25, C)
    K = ksize * ksize * C
    p = p.reshape(B, H, W, K)
    Ho, Wo = H // 2, W // 2
    p = p.reshape(B, Ho, 2, Wo, 2, K)
    p = jnp.transpose(p, (0, 2, 4, 1, 3, 5))          # (B, 2, 2, Ho, Wo, K)
    p = p.reshape(B, 4, Ho * Wo, K)
    N = Ho * Wo
    Np = ((N + 7) // 8) * 8                           # sublane-align the M dim
    if Np != N:
        p = jnp.pad(p, ((0, 0), (0, 0), (0, Np - N), (0, 0)))
    return p, Ho, Wo, Np


def conv_relu_pool(x_nhwc, w_oihw, bias, *, bt_cap=8):
    B, H, W, Cin = x_nhwc.shape
    Cout, _, ksize, _ = w_oihw.shape
    patches, Ho, Wo, Np = _im2col_pool_layout(x_nhwc, ksize=ksize, pad=ksize // 2)
    K = ksize * ksize * Cin
    # PyTorch (Cout, Cin, kh, kw) -> (kh, kw, Cin, Cout) -> (K, Cout)
    w_mat = jnp.transpose(w_oihw, (2, 3, 1, 0)).reshape(K, Cout)
    b_mat = bias.reshape(1, 1, Cout)

    Bt = _pick_bt(B, bt_cap)
    out = pl.pallas_call(
        conv_relu_pool_kernel,
        out_shape=jax.ShapeDtypeStruct((B, Np, Cout), jnp.float32),
        grid=(B // Bt,),
        in_specs=[
            pl.BlockSpec((Bt, 4, Np, K), lambda b: (b, 0, 0, 0)),
            pl.BlockSpec((K, Cout), lambda b: (0, 0)),
            pl.BlockSpec((1, 1, Cout), lambda b: (0, 0, 0)),
        ],
        out_specs=pl.BlockSpec((Bt, Np, Cout), lambda b: (b, 0, 0)),
        compiler_params=pltpu.CompilerParams(dimension_semantics=("parallel",)),
    )(patches, w_mat, b_mat)
    # Drop the zero-padded pooled rows and restore (B, Ho, Wo, Cout).
    return out[:, :Ho * Wo, :].reshape(B, Ho, Wo, Cout)


def linear(x, w_oi, bias):
    B, F = x.shape
    O = w_oi.shape[0]
    return pl.pallas_call(
        linear_kernel,
        out_shape=jax.ShapeDtypeStruct((B, O), jnp.float32),
    )(x, w_oi.T, bias.reshape(1, O))


def cnn_forward(params, x_nchw):
    """Mirrors CNN.forward: returns (logits, flattened_features)."""
    x = jnp.transpose(x_nchw, (0, 2, 3, 1))                      # NCHW -> NHWC
    x = conv_relu_pool(x, params["conv1_w"], params["conv1_b"])  # (B,14,14,16)
    x = conv_relu_pool(x, params["conv2_w"], params["conv2_b"])  # (B, 7, 7,32)
    B = x.shape[0]
    feat = jnp.transpose(x, (0, 3, 1, 2)).reshape(B, -1)         # NCHW flatten
    out = linear(feat, params["fc_w"], params["fc_b"])
    return out, feat


# Pure-JAX reference (ground truth at HIGHEST precision).
def cnn_reference(params, x_nchw):
    def block(x, w, b):
        y = lax.conv_general_dilated(
            x, w, window_strides=(1, 1), padding=((2, 2), (2, 2)),
            dimension_numbers=("NCHW", "OIHW", "NCHW"),
            precision=lax.Precision.HIGHEST)
        y = jnp.maximum(y + b[None, :, None, None], 0.0)
        return lax.reduce_window(y, -jnp.inf, lax.max,
                                 (1, 1, 2, 2), (1, 1, 2, 2), "VALID")

    y = block(x_nchw, params["conv1_w"], params["conv1_b"])
    y = block(y, params["conv2_w"], params["conv2_b"])
    feat = y.reshape(y.shape[0], -1)
    out = jnp.dot(feat, params["fc_w"].T,
                  precision=lax.Precision.HIGHEST) + params["fc_b"]
    return out, feat


if __name__ == "__main__":
    key = jax.random.PRNGKey(0)
    ks = jax.random.split(key, 7)
    params = {
        "conv1_w": jax.random.normal(ks[0], (16, 1, 5, 5), jnp.float32) * 0.1,
        "conv1_b": jax.random.normal(ks[1], (16,), jnp.float32) * 0.1,
        "conv2_w": jax.random.normal(ks[2], (32, 16, 5, 5), jnp.float32) * 0.05,
        "conv2_b": jax.random.normal(ks[3], (32,), jnp.float32) * 0.1,
        "fc_w": jax.random.normal(ks[4], (10, 32 * 7 * 7), jnp.float32) * 0.02,
        "fc_b": jax.random.normal(ks[5], (10,), jnp.float32) * 0.1,
    }
    # MNIST-style input; 28x28 is required by the Linear(32*7*7, 10) layer.
    x = jax.random.normal(ks[6], (2, 1, 28, 28), jnp.float32)

    out, feat = jax.jit(cnn_forward)(params, x)
    jax.block_until_ready((out, feat))

    ref_out, ref_feat = jax.jit(cnn_reference)(params, x)
    jax.block_until_ready((ref_out, ref_feat))

    assert out.shape == (2, 10) and feat.shape == (2, 32 * 7 * 7)
    # Kernel uses DEFAULT (single-pass) MXU precision; the reference is HIGHEST,
    # so allow bf16-operand-level deviation.
    np.testing.assert_allclose(np.asarray(feat), np.asarray(ref_feat),
                               rtol=2e-2, atol=2e-2)
    np.testing.assert_allclose(np.asarray(out), np.asarray(ref_out),
                               rtol=2e-2, atol=2e-2)
    print("KERNEL_OK")
</pallas_src>

<mosaic_0001>
module attributes {stable_mosaic.version = 11 : i64} {
  func.func @conv_relu_pool_kernel(%arg0: i32, %arg1: memref<1x4x200x25xf32, #tpu.memory_space<vmem>>, %arg2: memref<25x16xf32, #tpu.memory_space<vmem>>, %arg3: memref<1x1x16xf32, #tpu.memory_space<vmem>>, %arg4: memref<1x200x16xf32, #tpu.memory_space<vmem>>) attributes {dimension_semantics = [#tpu.dimension_semantics<parallel>], iteration_bounds = array<i64: 2>, scalar_prefetch = 0 : i64, scratch_operands = 0 : i64, tpu.core_type = #tpu.core_type<tc>, window_params = [{transform_indices = @transform_0, window_bounds = array<i64: 1, 4, 200, 25>}, {pipeline_mode = #tpu.pipeline_mode<synchronous>, transform_indices = @transform_1, window_bounds = array<i64: 25, 16>}, {pipeline_mode = #tpu.pipeline_mode<synchronous>, transform_indices = @transform_2, window_bounds = array<i64: 1, 1, 16>}, {transform_indices = @transform_3, window_bounds = array<i64: 1, 200, 16>}]} {
    %c0 = arith.constant 0 : index
    %c0_0 = arith.constant 0 : index
    %c0_1 = arith.constant 0 : index
    %c0_2 = arith.constant 0 : index
    %0 = vector.load %arg1[%c0, %c0_0, %c0_1, %c0_2] : memref<1x4x200x25xf32, #tpu.memory_space<vmem>>, vector<1x4x200x25xf32>
    %1 = vector.shape_cast %0 : vector<1x4x200x25xf32> to vector<800x25xf32>
    %c0_3 = arith.constant 0 : index
    %c0_4 = arith.constant 0 : index
    %2 = vector.load %arg2[%c0_3, %c0_4] : memref<25x16xf32, #tpu.memory_space<vmem>>, vector<25x16xf32>
    %cst = arith.constant dense<0.000000e+00> : vector<800x16xf32>
    %3 = tpu.matmul %1, %2, %cst {dimension_numbers = #tpu.dot_dimension_numbers<[1], [0], [0], [1], [0, 0, 1, 1], [], []>} : vector<800x25xf32>, vector<25x16xf32>, vector<800x16xf32> -> vector<800x16xf32>
    %4 = vector.shape_cast %3 : vector<800x16xf32> to vector<1x4x200x16xf32>
    %cst_5 = arith.constant dense<0xFF800000> : vector<1x200x16xf32>
    %5 = vector.multi_reduction <maximumf>, %4, %cst_5 [1] : vector<1x4x200x16xf32> to vector<1x200x16xf32>
    %c0_6 = arith.constant 0 : index
    %c0_7 = arith.constant 0 : index
    %c0_8 = arith.constant 0 : index
    %6 = vector.load %arg3[%c0_6, %c0_7, %c0_8] : memref<1x1x16xf32, #tpu.memory_space<vmem>>, vector<1x1x16xf32>
    %7 = vector.broadcast %6 : vector<1x1x16xf32> to vector<1x200x16xf32>
    %8 = arith.addf %5, %7 : vector<1x200x16xf32>
    %cst_9 = arith.constant 0.000000e+00 : f32
    %9 = vector.broadcast %cst_9 : f32 to vector<1x200x16xf32>
    %10 = arith.maximumf %8, %9 : vector<1x200x16xf32>
    %c0_10 = arith.constant 0 : index
    %c0_11 = arith.constant 0 : index
    %c0_12 = arith.constant 0 : index
    %11 = vector.load %arg4[%c0_10, %c0_11, %c0_12] : memref<1x200x16xf32, #tpu.memory_space<vmem>>, vector<1x200x16xf32>
    tpu.vector_store %arg4[%c0_10, %c0_11, %c0_12], %10 {strides = array<i32>} : memref<1x200x16xf32, #tpu.memory_space<vmem>>, vector<1x200x16xf32>,
    return
  }
  func.func @transform_0(%arg0: i32) -> (i32, i32, i32, i32) {
    %c0_i32 = arith.constant 0 : i32
    %c0_i32_0 = arith.constant 0 : i32
    %c0_i32_1 = arith.constant 0 : i32
    %c0_i32_2 = arith.constant 0 : i32
    return %arg0, %c0_i32, %c0_i32_0, %c0_i32_1 : i32, i32, i32, i32
  }
  func.func @transform_1(%arg0: i32) -> (i32, i32) {
    %c0_i32 = arith.constant 0 : i32
    %c0_i32_0 = arith.constant 0 : i32
    %c0_i32_1 = arith.constant 0 : i32
    return %c0_i32, %c0_i32_0 : i32, i32
  }
  func.func @transform_2(%arg0: i32) -> (i32, i32, i32) {
    %c0_i32 = arith.constant 0 : i32
    %c0_i32_0 = arith.constant 0 : i32
    %c0_i32_1 = arith.constant 0 : i32
    %c0_i32_2 = arith.constant 0 : i32
    return %c0_i32, %c0_i32_0, %c0_i32_1 : i32, i32, i32
  }
  func.func @transform_3(%arg0: i32) -> (i32, i32, i32) {
    %c0_i32 = arith.constant 0 : i32
    %c0_i32_0 = arith.constant 0 : i32
    %c0_i32_1 = arith.constant 0 : i32
    return %arg0, %c0_i32, %c0_i32_0 : i32, i32, i32
  }
}

module attributes {stable_mosaic.version = 11 : i64} {
  func.func @conv_relu_pool_kernel(%arg0: i32, %arg1: memref<1x4x56x400xf32, #tpu.memory_space<vmem>>, %arg2: memref<400x32xf32, #tpu.memory_space<vmem>>, %arg3: memref<1x1x32xf32, #tpu.memory_space<vmem>>, %arg4: memref<1x56x32xf32, #tpu.memory_space<vmem>>) attributes {dimension_semantics = [#tpu.dimension_semantics<parallel>], iteration_bounds = array<i64: 2>, scalar_prefetch = 0 : i64, scratch_operands = 0 : i64, tpu.core_type = #tpu.core_type<tc>, window_params = [{transform_indices = @transform_0, window_bounds = array<i64: 1, 4, 56, 400>}, {pipeline_mode = #tpu.pipeline_mode<synchronous>, transform_indices = @transform_1, window_bounds = array<i64: 400, 32>}, {pipeline_mode = #tpu.pipeline_mode<synchronous>, transform_indices = @transform_2, window_bounds = array<i64: 1, 1, 32>}, {transform_indices = @transform_3, window_bounds = array<i64: 1, 56, 32>}]} {
    %c0 = arith.constant 0 : index
    %c0_0 = arith.constant 0 : index
    %c0_1 = arith.constant 0 : index
    %c0_2 = arith.constant 0 : index
    %0 = vector.load %arg1[%c0, %c0_0, %c0_1, %c0_2] : memref<1x4x56x400xf32, #tpu.memory_space<vmem>>, vector<1x4x56x400xf32>
    %1 = vector.shape_cast %0 : vector<1x4x56x400xf32> to vector<224x400xf32>
    %c0_3 = arith.constant 0 : index
    %c0_4 = arith.constant 0 : index
    %2 = vector.load %arg2[%c0_3, %c0_4] : memref<400x32xf32, #tpu.memory_space<vmem>>, vector<400x32xf32>
    %cst = arith.constant dense<0.000000e+00> : vector<224x32xf32>
    %3 = tpu.matmul %1, %2, %cst {dimension_numbers = #tpu.dot_dimension_numbers<[1], [0], [0], [1], [0, 0, 1, 1], [], []>} : vector<224x400xf32>, vector<400x32xf32>, vector<224x32xf32> -> vector<224x32xf32>
    %4 = vector.shape_cast %3 : vector<224x32xf32> to vector<1x4x56x32xf32>
    %cst_5 = arith.constant dense<0xFF800000> : vector<1x56x32xf32>
    %5 = vector.multi_reduction <maximumf>, %4, %cst_5 [1] : vector<1x4x56x32xf32> to vector<1x56x32xf32>
    %c0_6 = arith.constant 0 : index
    %c0_7 = arith.constant 0 : index
    %c0_8 = arith.constant 0 : index
    %6 = vector.load %arg3[%c0_6, %c0_7, %c0_8] : memref<1x1x32xf32, #tpu.memory_space<vmem>>, vector<1x1x32xf32>
    %7 = vector.broadcast %6 : vector<1x1x32xf32> to vector<1x56x32xf32>
    %8 = arith.addf %5, %7 : vector<1x56x32xf32>
    %cst_9 = arith.constant 0.000000e+00 : f32
    %9 = vector.broadcast %cst_9 : f32 to vector<1x56x32xf32>
    %10 = arith.maximumf %8, %9 : vector<1x56x32xf32>
    %c0_10 = arith.constant 0 : index
    %c0_11 = arith.constant 0 : index
    %c0_12 = arith.constant 0 : index
    %11 = vector.load %arg4[%c0_10, %c0_11, %c0_12] : memref<1x56x32xf32, #tpu.memory_space<vmem>>, vector<1x56x32xf32>
    tpu.vector_store %arg4[%c0_10, %c0_11, %c0_12], %10 {strides = array<i32>} : memref<1x56x32xf32, #tpu.memory_space<vmem>>, vector<1x56x32xf32>,
    return
  }
  func.func @transform_0(%arg0: i32) -> (i32, i32, i32, i32) {
    %c0_i32 = arith.constant 0 : i32
    %c0_i32_0 = arith.constant 0 : i32
    %c0_i32_1 = arith.constant 0 : i32
    %c0_i32_2 = arith.constant 0 : i32
    return %arg0, %c0_i32, %c0_i32_0, %c0_i32_1 : i32, i32, i32, i32
  }
  func.func @transform_1(%arg0: i32) -> (i32, i32) {
    %c0_i32 = arith.constant 0 : i32
    %c0_i32_0 = arith.constant 0 : i32
    %c0_i32_1 = arith.constant 0 : i32
    return %c0_i32, %c0_i32_0 : i32, i32
  }
  func.func @transform_2(%arg0: i32) -> (i32, i32, i32) {
    %c0_i32 = arith.constant 0 : i32
    %c0_i32_0 = arith.constant 0 : i32
    %c0_i32_1 = arith.constant 0 : i32
    %c0_i32_2 = arith.constant 0 : i32
    return %c0_i32, %c0_i32_0, %c0_i32_1 : i32, i32, i32
  }
  func.func @transform_3(%arg0: i32) -> (i32, i32, i32) {
    %c0_i32 = arith.constant 0 : i32
    %c0_i32_0 = arith.constant 0 : i32
    %c0_i32_1 = arith.constant 0 : i32
    return %arg0, %c0_i32, %c0_i32_0 : i32, i32, i32
  }
}

module attributes {stable_mosaic.version = 11 : i64} {
  func.func @linear_kernel(%arg0: memref<2x1568xf32, #tpu.memory_space<vmem>>, %arg1: memref<1568x10xf32, #tpu.memory_space<vmem>>, %arg2: memref<1x10xf32, #tpu.memory_space<vmem>>, %arg3: memref<2x10xf32, #tpu.memory_space<vmem>>) attributes {dimension_semantics = [], scalar_prefetch = 0 : i64, scratch_operands = 0 : i64, tpu.core_type = #tpu.core_type<tc>} {
    %c0 = arith.constant 0 : index
    %c0_0 = arith.constant 0 : index
    %0 = vector.load %arg0[%c0, %c0_0] : memref<2x1568xf32, #tpu.memory_space<vmem>>, vector<2x1568xf32>
    %c0_1 = arith.constant 0 : index
    %c0_2 = arith.constant 0 : index
    %1 = vector.load %arg1[%c0_1, %c0_2] : memref<1568x10xf32, #tpu.memory_space<vmem>>, vector<1568x10xf32>
    %cst = arith.constant dense<0.000000e+00> : vector<2x10xf32>
    %2 = tpu.matmul %0, %1, %cst {dimension_numbers = #tpu.dot_dimension_numbers<[1], [0], [0], [1], [0, 0, 1, 1], [], []>} : vector<2x1568xf32>, vector<1568x10xf32>, vector<2x10xf32> -> vector<2x10xf32>
    %c0_3 = arith.constant 0 : index
    %c0_4 = arith.constant 0 : index
    %3 = vector.load %arg2[%c0_3, %c0_4] : memref<1x10xf32, #tpu.memory_space<vmem>>, vector<1x10xf32>
    %4 = vector.broadcast %3 : vector<1x10xf32> to vector<2x10xf32>
    %5 = arith.addf %2, %4 : vector<2x10xf32>
    %c0_5 = arith.constant 0 : index
    %c0_6 = arith.constant 0 : index
    %6 = vector.load %arg3[%c0_5, %c0_6] : memref<2x10xf32, #tpu.memory_space<vmem>>, vector<2x10xf32>
    tpu.vector_store %arg3[%c0_5, %c0_6], %5 {strides = array<i32>} : memref<2x10xf32, #tpu.memory_space<vmem>>, vector<2x10xf32>,
    return
  }
}

</mosaic_0001>

<llo_original>
// kernel: cnn_forward.3
$region0: #{cnn_forward.3}
  #allocation0 [shape = 'u32[]', space=smem, size = 0x4, offset = 0x4, fixed_abs, tag = 'smem constant byte address 0x4 - core index']
  #allocation1 [shape = 'u32[72,128]{1,0:T(1,128)}', space=vmem, size = 0x9000, scoped, tag = 'internal scratch']
  %s0 = inlined_call_operand.vmem [shape: f32[2,4,200,25], index: 0, kind: input, shape index: {}]
  %s1 = inlined_call_operand.vmem [shape: f32[25,16], index: 1, kind: input, shape index: {}]
  %s2 = inlined_call_operand.vmem [shape: f32[1,1,16], index: 2, kind: input, shape index: {}]
  %s3 = inlined_call_operand.vmem [shape: f32[2,200,16], index: 3, kind: output, shape index: {}]
  %s4 = sld [smem:[#allocation0]]
  $region45: #{cnn_forward.3} parent=0
    _
  %s6 = ssub.s32 1, %s4
  %s7 = scalar_select 0, %s6, %s4
  loop: start=0, step=1, limit=4
  $region2: #{cnn_forward.3} parent=0 // loop_pre_header
    _
  $region3: #{cnn_forward.3} parent=0 // loop_header
    %s9 = sphi 0, %s13
    %p10 = scmp.ge.s32.totalorder %s9, 4
    %s19 = sphi 0, %s21
    %s22 = sphi 0, %s19
    %s23 = sphi 0, %s22
    %s39 = sphi 0, %s23
    %s43 = sphi 0, %s43
    %s45 = sphi 0, %s43
    %s46 = sphi 0, %s45
    %s60 = sphi 0, %s46
    %s64 = sphi 0, %s64
    %s66 = sphi 0, %s64
    %s67 = sphi 0, %s66
    %s81 = sphi 0, %s67
    %s87 = sphi 0, %s89
    %s90 = sphi 0, %s87
    %s91 = sphi 0, %s90
    %s107 = sphi 0, %s91
  $region4: #{cnn_forward.3} parent=0 // loop_header_branch
    %12 = sbr.rel (%p10) target = $region8
  $region5: #{cnn_forward.3} parent=0 // loop_body
    %s14 = ssub.s32 %s9, 1
    %s15 = ssub.s32 %s9, 2
    %s16 = sadd.s32 %s9, 1
    %s17 = ssub.s32 %s9, %s16
    %p18 = scmp.eq.s32.totalorder %s17, 0
    %s20 = sadd.s32 %s19, 1
    %s21 = scalar_select %p18, %s19, %s20
    %p24 = pneg %p18
    %p25 = scmp.eq.s32.totalorder %s9, 1
    %p26 = por %p24, %p25
    %p27 = scmp.ne.s32.totalorder %s19, %s22
    %p28 = scmp.eq.s32.totalorder %s9, 0
    %p29 = por %p27, %p28
    %p30 = scmp.ne.s32.totalorder %s19, %s22
    %p31 = scmp.eq.s32.totalorder %s14, 1
    %p32 = por %p30, %p31
    %p33 = scmp.ne.s32.totalorder %s22, %s23
    %p34 = scmp.eq.s32.totalorder %s14, 0
    %p35 = por %p33, %p34
    %p36 = scmp.ne.s32.totalorder %s22, %s23
    %p37 = scmp.eq.s32.totalorder %s15, 1
    %p38 = por %p36, %p37
    %p40 = scmp.ne.s32.totalorder %s23, %s39
    %p41 = scmp.eq.s32.totalorder %s15, 0
    %p42 = por %p40, %p41
    %s44 = sadd.s32 %s43, 1
    %p47 = scmp.eq.s32.totalorder %s9, 1
    %p48 = scmp.ne.s32.totalorder %s43, %s45
    %p49 = scmp.eq.s32.totalorder %s9, 0
    %p50 = por %p48, %p49
    %p51 = scmp.ne.s32.totalorder %s43, %s45
    %p52 = scmp.eq.s32.totalorder %s14, 1
    %p53 = por %p51, %p52
    %p54 = scmp.ne.s32.totalorder %s45, %s46
    %p55 = scmp.eq.s32.totalorder %s14, 0
    %p56 = por %p54, %p55
    %p57 = scmp.ne.s32.totalorder %s45, %s46
    %p58 = scmp.eq.s32.totalorder %s15, 1
    %p59 = por %p57, %p58
    %p61 = scmp.ne.s32.totalorder %s46, %s60
    %p62 = scmp.eq.s32.totalorder %s15, 0
    %p63 = por %p61, %p62
    %s65 = sadd.s32 %s64, 1
    %p68 = scmp.eq.s32.totalorder %s9, 1
    %p69 = scmp.ne.s32.totalorder %s64, %s66
    %p70 = scmp.eq.s32.totalorder %s9, 0
    %p71 = por %p69, %p70
    %p72 = scmp.ne.s32.totalorder %s64, %s66
    %p73 = scmp.eq.s32.totalorder %s14, 1
    %p74 = por %p72, %p73
    %p75 = scmp.ne.s32.totalorder %s66, %s67
    %p76 = scmp.eq.s32.totalorder %s14, 0
    %p77 = por %p75, %p76
    %p78 = scmp.ne.s32.totalorder %s66, %s67
    %p79 = scmp.eq.s32.totalorder %s15, 1
    %p80 = por %p78, %p79
    %p82 = scmp.ne.s32.totalorder %s67, %s81
    %p83 = scmp.eq.s32.totalorder %s15, 0
    %p84 = por %p82, %p83
    %s85 = ssub.s32 %s9, %s16
    %p86 = scmp.eq.s32.totalorder %s85, 0
    %s88 = sadd.s32 %s87, 1
    %s89 = scalar_select %p86, %s87, %s88
    %p92 = pneg %p86
    %p93 = scmp.eq.s32.totalorder %s9, 1
    %p94 = por %p92, %p93
    %p95 = scmp.ne.s32.totalorder %s87, %s90
    %p96 = scmp.eq.s32.totalorder %s9, 0
    %p97 = por %p95, %p96
    %p98 = scmp.ne.s32.totalorder %s87, %s90
    %p99 = scmp.eq.s32.totalorder %s14, 1
    %p100 = por %p98, %p99
    %p101 = scmp.ne.s32.totalorder %s90, %s91
    %p102 = scmp.eq.s32.totalorder %s14, 0
    %p103 = por %p101, %p102
    %p104 = scmp.ne.s32.totalorder %s90, %s91
    %p105 = scmp.eq.s32.totalorder %s15, 1
    %p106 = por %p104, %p105
    %p108 = scmp.ne.s32.totalorder %s91, %s107
    %p109 = scmp.eq.s32.totalorder %s15, 0
    %p110 = por %p108, %p109
    %p111 = scmp.le.s32.totalorder 1, %s9
    %p112 = scmp.lt.s32.totalorder %s9, 3
    %p113 = pnand %p111, %p112
    %p114 = pneg %p113
    // Predicated region
    $region9: #{cnn_forward.3} parent=5 // pred_check
      _
    $region10: #{cnn_forward.3} parent=5 // pred_check_branch
      %116 = sbr.rel (%p113) target = $region12
    $region11: #{cnn_forward.3} parent=5 // pred_region
      %s117 = ssub.s32 %s9, 1
      // Predicated region
      $region13: #{cnn_forward.3} parent=11 // pred_check
        %p118 = pneg %p56
      $region14: #{cnn_forward.3} parent=11 // pred_check_branch
        %120 = sbr.rel (%p118) target = $region16
      $region15: #{cnn_forward.3} parent=11 // pred_region
        _
      $region16: #{cnn_forward.3} parent=11 // pred_fallthru
        _
      // Predicated region
      $region17: #{cnn_forward.3} parent=11 // pred_check
        %p121 = pneg %p77
      $region18: #{cnn_forward.3} parent=11 // pred_check_branch
        %123 = sbr.rel (%p121) target = $region20
      $region19: #{cnn_forward.3} parent=11 // pred_region
        _
      $region20: #{cnn_forward.3} parent=11 // pred_fallthru
        _
    $region12: #{cnn_forward.3} parent=5 // pred_fallthru
      _
    %p124 = scmp.lt.s32.totalorder %s9, 2
    // Predicated region
    $region21: #{cnn_forward.3} parent=5 // pred_check
      %p125 = pneg %p124
    $region22: #{cnn_forward.3} parent=5 // pred_check_branch
      %127 = sbr.rel (%p125) target = $region24
    $region23: #{cnn_forward.3} parent=5 // pred_region
      // Predicated region
      $region25: #{cnn_forward.3} parent=23 // pred_check
        %p128 = pneg %p29
      $region26: #{cnn_forward.3} parent=23 // pred_check_branch
        %130 = sbr.rel (%p128) target = $region28
      $region27: #{cnn_forward.3} parent=23 // pred_region
        %p131 = scmp.lt.s32.totalorder %s9, 1
        %s132 = scalar_select %p131, %s9, 1
        %s133 = smul.addr %s132, 100
        %s134 = smul.addr %s133, 8
        %s135 = scalar_lea.vmem %s0, %s134
      $region28: #{cnn_forward.3} parent=23 // pred_fallthru
        _
    $region24: #{cnn_forward.3} parent=5 // pred_fallthru
      _
    %p136 = scmp.le.s32.totalorder 1, %s9
    %p137 = scmp.lt.s32.totalorder %s9, 3
    %p138 = pnand %p136, %p137
    %p139 = pneg %p138
    // Predicated region
    $region29: #{cnn_forward.3} parent=5 // pred_check
      _
    $region30: #{cnn_forward.3} parent=5 // pred_check_branch
      %141 = sbr.rel (%p138) target = $region32
    $region31: #{cnn_forward.3} parent=5 // pred_region
      %s142 = ssub.s32 %s9, 1
      %p143 = scmp.lt.s32.totalorder %s14, 1
      %s144 = scalar_select %p143, %s14, 1
      %s145 = smul.addr %s144, 100
      %s146 = smul.addr %s145, 8
      %s147 = scalar_lea.vmem %s0, %s146
      %p148 = pneg %p35
      %p149 = pneg %p32
      %p150 = pneg %p56
      %p151 = pneg %p53
      %p152 = pneg %p77
      %p153 = pneg %p74
      %p154 = pneg %p103
      %p155 = pneg %p100
      %p156 = scmp.lt.s32.totalorder %s14, 1
      %s157 = scalar_select %p156, %s14, 1
      %s158 = smul.addr %s157, 25
      %s159 = smul.addr %s158, 8
      %s160 = scalar_lea.vmem %s3, %s159
      %p161 = scmp.lt.s32.totalorder %s14, 1
      %s162 = scalar_select %p161, %s14, 1
      %s163 = smul.addr %s162, 100
      %s164 = smul.addr %s163, 8
      %s165 = scalar_lea.vmem %s0, %s164
      %p166 = scmp.lt.s32.totalorder %s14, 1
      %s167 = scalar_select %p166, %s14, 1
      %s168 = smul.addr %s167, 25
      %s169 = smul.addr %s168, 8
      %s170 = scalar_lea.vmem %s3, %s169
      %v171 = vld [vmem:[%s165] sm:$0xff]
      %v172 = vld [vmem:[%s165 + $0x8] sm:$0xff]
      %v173 = vld [vmem:[%s165 + $0x10] sm:$0xff]
      %v174 = vld [vmem:[%s165 + $0x18] sm:$0xff]
      %v175 = vld [vmem:[%s165 + $0x20] sm:$0xff]
      %v176 = vld [vmem:[%s165 + $0x28] sm:$0xff]
      %v177 = vld [vmem:[%s165 + $0x30] sm:$0xff]
      %v178 = vld [vmem:[%s165 + $0x38] sm:$0xff]
      %v179 = vld [vmem:[%s165 + $0x40] sm:$0xff]
      %v180 = vld [vmem:[%s165 + $0x48] sm:$0xff]
      %v181 = vld [vmem:[%s165 + $0x50] sm:$0xff]
      %v182 = vld [vmem:[%s165 + $0x58] sm:$0xff]
      %v183 = vld [vmem:[%s165 + $0x60] sm:$0xff]
      %v184 = vld [vmem:[%s165 + $0x68] sm:$0xff]
      %v185 = vld [vmem:[%s165 + $0x70] sm:$0xff]
      %v186 = vld [vmem:[%s165 + $0x78] sm:$0xff]
      %v187 = vld [vmem:[%s165 + $0x80] sm:$0xff]
      %v188 = vld [vmem:[%s165 + $0x88] sm:$0xff]
      %v189 = vld [vmem:[%s165 + $0x90] sm:$0xff]
      %v190 = vld [vmem:[%s165 + $0x98] sm:$0xff]
      %v191 = vld [vmem:[%s165 + $0xa0] sm:$0xff]
      %v192 = vld [vmem:[%s165 + $0xa8] sm:$0xff]
      %v193 = vld [vmem:[%s165 + $0xb0] sm:$0xff]
      %v194 = vld [vmem:[%s165 + $0xb8] sm:$0xff]
      %v195 = vld [vmem:[%s165 + $0xc0] sm:$0xff]
      %v196 = vld [vmem:[%s165 + $0xc8] sm:$0xff]
      %v197 = vld [vmem:[%s165 + $0xd0] sm:$0xff]
      %v198 = vld [vmem:[%s165 + $0xd8] sm:$0xff]
      %v199 = vld [vmem:[%s165 + $0xe0] sm:$0xff]
      %v200 = vld [vmem:[%s165 + $0xe8] sm:$0xff]
      %v201 = vld [vmem:[%s165 + $0xf0] sm:$0xff]
      %v202 = vld [vmem:[%s165 + $0xf8] sm:$0xff]
      %v203 = vld [vmem:[%s165 + $0x100] sm:$0xff]
      %v204 = vld [vmem:[%s165 + $0x108] sm:$0xff]
      %v205 = vld [vmem:[%s165 + $0x110] sm:$0xff]
      %v206 = vld [vmem:[%s165 + $0x118] sm:$0xff]
      %v207 = vld [vmem:[%s165 + $0x120] sm:$0xff]
      %v208 = vld [vmem:[%s165 + $0x128] sm:$0xff]
      %v209 = vld [vmem:[%s165 + $0x130] sm:$0xff]
      %v210 = vld [vmem:[%s165 + $0x138] sm:$0xff]
      %v211 = vld [vmem:[%s165 + $0x140] sm:$0xff]
      %v212 = vld [vmem:[%s165 + $0x148] sm:$0xff]
      %v213 = vld [vmem:[%s165 + $0x150] sm:$0xff]
      %v214 = vld [vmem:[%s165 + $0x158] sm:$0xff]
      %v215 = vld [vmem:[%s165 + $0x160] sm:$0xff]
      %v216 = vld [vmem:[%s165 + $0x168] sm:$0xff]
      %v217 = vld [vmem:[%s165 + $0x170] sm:$0xff]
      %v218 = vld [vmem:[%s165 + $0x178] sm:$0xff]
      %v219 = vld [vmem:[%s165 + $0x180] sm:$0xff]
      %v220 = vld [vmem:[%s165 + $0x188] sm:$0xff]
      %v221 = vld [vmem:[%s165 + $0x190] sm:$0xff]
      %v222 = vld [vmem:[%s165 + $0x198] sm:$0xff]
      %v223 = vld [vmem:[%s165 + $0x1a0] sm:$0xff]
      %v224 = vld [vmem:[%s165 + $0x1a8] sm:$0xff]
      %v225 = vld [vmem:[%s165 + $0x1b0] sm:$0xff]
      %v226 = vld [vmem:[%s165 + $0x1b8] sm:$0xff]
      %v227 = vld [vmem:[%s165 + $0x1c0] sm:$0xff]
      %v228 = vld [vmem:[%s165 + $0x1c8] sm:$0xff]
      %v229 = vld [vmem:[%s165 + $0x1d0] sm:$0xff]
      %v230 = vld [vmem:[%s165 + $0x1d8] sm:$0xff]
      %v231 = vld [vmem:[%s165 + $0x1e0] sm:$0xff]
      %v232 = vld [vmem:[%s165 + $0x1e8] sm:$0xff]
      %v233 = vld [vmem:[%s165 + $0x1f0] sm:$0xff]
      %v234 = vld [vmem:[%s165 + $0x1f8] sm:$0xff]
      %v235 = vld [vmem:[%s165 + $0x200] sm:$0xff]
      %v236 = vld [vmem:[%s165 + $0x208] sm:$0xff]
      %v237 = vld [vmem:[%s165 + $0x210] sm:$0xff]
      %v238 = vld [vmem:[%s165 + $0x218] sm:$0xff]
      %v239 = vld [vmem:[%s165 + $0x220] sm:$0xff]
      %v240 = vld [vmem:[%s165 + $0x228] sm:$0xff]
      %v241 = vld [vmem:[%s165 + $0x230] sm:$0xff]
      %v242 = vld [vmem:[%s165 + $0x238] sm:$0xff]
      %v243 = vld [vmem:[%s165 + $0x240] sm:$0xff]
      %v244 = vld [vmem:[%s165 + $0x248] sm:$0xff]
      %v245 = vld [vmem:[%s165 + $0x250] sm:$0xff]
      %v246 = vld [vmem:[%s165 + $0x258] sm:$0xff]
      %v247 = vld [vmem:[%s165 + $0x260] sm:$0xff]
      %v248 = vld [vmem:[%s165 + $0x268] sm:$0xff]
      %v249 = vld [vmem:[%s165 + $0x270] sm:$0xff]
      %v250 = vld [vmem:[%s165 + $0x278] sm:$0xff]
      %v251 = vld [vmem:[%s165 + $0x280] sm:$0xff]
      %v252 = vld [vmem:[%s165 + $0x288] sm:$0xff]
      %v253 = vld [vmem:[%s165 + $0x290] sm:$0xff]
      %v254 = vld [vmem:[%s165 + $0x298] sm:$0xff]
      %v255 = vld [vmem:[%s165 + $0x2a0] sm:$0xff]
      %v256 = vld [vmem:[%s165 + $0x2a8] sm:$0xff]
      %v257 = vld [vmem:[%s165 + $0x2b0] sm:$0xff]
      %v258 = vld [vmem:[%s165 + $0x2b8] sm:$0xff]
      %v259 = vld [vmem:[%s165 + $0x2c0] sm:$0xff]
      %v260 = vld [vmem:[%s165 + $0x2c8] sm:$0xff]
      %v261 = vld [vmem:[%s165 + $0x2d0] sm:$0xff]
      %v262 = vld [vmem:[%s165 + $0x2d8] sm:$0xff]
      %v263 = vld [vmem:[%s165 + $0x2e0] sm:$0xff]
      %v264 = vld [vmem:[%s165 + $0x2e8] sm:$0xff]
      %v265 = vld [vmem:[%s165 + $0x2f0] sm:$0xff]
      %v266 = vld [vmem:[%s165 + $0x2f8] sm:$0xff]
      %v267 = vld [vmem:[%s165 + $0x300] sm:$0xff]
      %v268 = vld [vmem:[%s165 + $0x308] sm:$0xff]
      %v269 = vld [vmem:[%s165 + $0x310] sm:$0xff]
      %v270 = vld [vmem:[%s165 + $0x318] sm:$0xff]
      %v271 = vld [vmem:[%s1] sm:$0xff]
      %v272 = vld [vmem:[%s1 + $0x8] sm:$0xff]
      %v273 = vld [vmem:[%s1 + $0x10] sm:$0xff]
      %v274 = vld [vmem:[%s1 + $0x18] sm:$0x1]
      %vm275 = vcmask 203776
      %v277 = vsel %vm275, %v171, 0
      %v280 = vsel %vm275, %v172, 0
      %v283 = vsel %vm275, %v173, 0
      %v286 = vsel %vm275, %v174, 0
      %v289 = vsel %vm275, %v175, 0
      %v292 = vsel %vm275, %v176, 0
      %v295 = vsel %vm275, %v177, 0
      %v298 = vsel %vm275, %v178, 0
      %v301 = vsel %vm275, %v179, 0
      %v304 = vsel %vm275, %v180, 0
      %v307 = vsel %vm275, %v181, 0
      %v310 = vsel %vm275, %v182, 0
      %v313 = vsel %vm275, %v183, 0
      %v316 = vsel %vm275, %v184, 0
      %v319 = vsel %vm275, %v185, 0
      %v322 = vsel %vm275, %v186, 0
      %v325 = vsel %vm275, %v187, 0
      %v328 = vsel %vm275, %v188, 0
      %v331 = vsel %vm275, %v189, 0
      %v334 = vsel %vm275, %v190, 0
      %v337 = vsel %vm275, %v191, 0
      %v340 = vsel %vm275, %v192, 0
      %v343 = vsel %vm275, %v193, 0
      %v346 = vsel %vm275, %v194, 0
      %v349 = vsel %vm275, %v195, 0
      %v352 = vsel %vm275, %v196, 0
      %v355 = vsel %vm275, %v197, 0
      %v358 = vsel %vm275, %v198, 0
      %v361 = vsel %vm275, %v199, 0
      %v364 = vsel %vm275, %v200, 0
      %v367 = vsel %vm275, %v201, 0
      %v370 = vsel %vm275, %v202, 0
      %v373 = vsel %vm275, %v203, 0
      %v376 = vsel %vm275, %v204, 0
      %v379 = vsel %vm275, %v205, 0
      %v382 = vsel %vm275, %v206, 0
      %v385 = vsel %vm275, %v207, 0
      %v388 = vsel %vm275, %v208, 0
      %v391 = vsel %vm275, %v209, 0
      %v394 = vsel %vm275, %v210, 0
      %v397 = vsel %vm275, %v211, 0
      %v400 = vsel %vm275, %v212, 0
      %v403 = vsel %vm275, %v213, 0
      %v406 = vsel %vm275, %v214, 0
      %v409 = vsel %vm275, %v215, 0
      %v412 = vsel %vm275, %v216, 0
      %v415 = vsel %vm275, %v217, 0
      %v418 = vsel %vm275, %v218, 0
      %v421 = vsel %vm275, %v219, 0
      %v424 = vsel %vm275, %v220, 0
      %v427 = vsel %vm275, %v221, 0
      %v430 = vsel %vm275, %v222, 0
      %v433 = vsel %vm275, %v223, 0
      %v436 = vsel %vm275, %v224, 0
      %v439 = vsel %vm275, %v225, 0
      %v442 = vsel %vm275, %v226, 0
      %v445 = vsel %vm275, %v227, 0
      %v448 = vsel %vm275, %v228, 0
      %v451 = vsel %vm275, %v229, 0
      %v454 = vsel %vm275, %v230, 0
      %v457 = vsel %vm275, %v231, 0
      %v460 = vsel %vm275, %v232, 0
      %v463 = vsel %vm275, %v233, 0
      %v466 = vsel %vm275, %v234, 0
      %v469 = vsel %vm275, %v235, 0
      %v472 = vsel %vm275, %v236, 0
      %v475 = vsel %vm275, %v237, 0
      %v478 = vsel %vm275, %v238, 0
      %v481 = vsel %vm275, %v239, 0
      %v484 = vsel %vm275, %v240, 0
      %v487 = vsel %vm275, %v241, 0
      %v490 = vsel %vm275, %v242, 0
      %v493 = vsel %vm275, %v243, 0
      %v496 = vsel %vm275, %v244, 0
      %v499 = vsel %vm275, %v245, 0
      %v502 = vsel %vm275, %v246, 0
      %v505 = vsel %vm275, %v247, 0
      %v508 = vsel %vm275, %v248, 0
      %v511 = vsel %vm275, %v249, 0
      %v514 = vsel %vm275, %v250, 0
      %v517 = vsel %vm275, %v251, 0
      %v520 = vsel %vm275, %v252, 0
      %v523 = vsel %vm275, %v253, 0
      %v526 = vsel %vm275, %v254, 0
      %v529 = vsel %vm275, %v255, 0
      %v532 = vsel %vm275, %v256, 0
      %v535 = vsel %vm275, %v257, 0
      %v538 = vsel %vm275, %v258, 0
      %v541 = vsel %vm275, %v259, 0
      %v544 = vsel %vm275, %v260, 0
      %v547 = vsel %vm275, %v261, 0
      %v550 = vsel %vm275, %v262, 0
      %v553 = vsel %vm275, %v263, 0
      %v556 = vsel %vm275, %v264, 0
      %v559 = vsel %vm275, %v265, 0
      %v562 = vsel %vm275, %v266, 0
      %v565 = vsel %vm275, %v267, 0
      %v568 = vsel %vm275, %v268, 0
      %v571 = vsel %vm275, %v269, 0
      %v574 = vsel %vm275, %v270, 0
      %vm576 = vcmask 1040384
      %v578 = vsel %vm576, %v274, 0
      %580 = vmatpush.msra.mxu0 0.0
      %581 = vmatpush.msra.mxu0 0.0
      %582 = vmatpush.msra.mxu0 0.0
      %583 = vmatpush.msra.mxu0 0.0
      %584 = vmatpush.msra.mxu0 0.0
      %585 = vmatpush.msra.mxu0 0.0
      %586 = vmatpush.msra.mxu0 0.0
      %587 = vmatpush.msra.mxu0 0.0
      %588 = vmatpush.msra.mxu0 0.0
      %589 = vmatpush.msra.mxu0 0.0
      %590 = vmatpush.msra.mxu0 0.0
      %591 = vmatpush.msra.mxu0 0.0
      %592 = vmatpush.msra.mxu0 %v578
      %593 = vmatpush.msra.mxu0 %v273
      %594 = vmatpush.msra.mxu0 %v272
      %595 = vmatpush.msra.mxu0 %v271
      %596 = vmatmul.f32.gmra.mxu0 %v277
      %v597 = vpop.f32.mrf.mxu0
      %v598 = vadd.f32 0.0, %v597
      %599 = vmatmul.f32.gmra.mxu0 %v280
      %v600 = vpop.f32.mrf.mxu0
      %v601 = vadd.f32 0.0, %v600
      %602 = vmatmul.f32.gmra.mxu0 %v283
      %v603 = vpop.f32.mrf.mxu0
      %v604 = vadd.f32 0.0, %v603
      %605 = vmatmul.f32.gmra.mxu0 %v286
      %v606 = vpop.f32.mrf.mxu0
      %v607 = vadd.f32 0.0, %v606
      %608 = vmatmul.f32.gmra.mxu0 %v289
      %v609 = vpop.f32.mrf.mxu0
      %v610 = vadd.f32 0.0, %v609
      %611 = vmatmul.f32.gmra.mxu0 %v292
      %v612 = vpop.f32.mrf.mxu0
      %v613 = vadd.f32 0.0, %v612
      %614 = vmatmul.f32.gmra.mxu0 %v295
      %v615 = vpop.f32.mrf.mxu0
      %v616 = vadd.f32 0.0, %v615
      %617 = vmatmul.f32.gmra.mxu0 %v298
      %v618 = vpop.f32.mrf.mxu0
      %v619 = vadd.f32 0.0, %v618
      %620 = vmatmul.f32.gmra.mxu0 %v301
      %v621 = vpop.f32.mrf.mxu0
      %v622 = vadd.f32 0.0, %v621
      %623 = vmatmul.f32.gmra.mxu0 %v304
      %v624 = vpop.f32.mrf.mxu0
      %v625 = vadd.f32 0.0, %v624
      %626 = vmatmul.f32.gmra.mxu0 %v307
      %v627 = vpop.f32.mrf.mxu0
      %v628 = vadd.f32 0.0, %v627
      %629 = vmatmul.f32.gmra.mxu0 %v310
      %v630 = vpop.f32.mrf.mxu0
      %v631 = vadd.f32 0.0, %v630
      %632 = vmatmul.f32.gmra.mxu0 %v313
      %v633 = vpop.f32.mrf.mxu0
      %v634 = vadd.f32 0.0, %v633
      %635 = vmatmul.f32.gmra.mxu0 %v316
      %v636 = vpop.f32.mrf.mxu0
      %v637 = vadd.f32 0.0, %v636
      %638 = vmatmul.f32.gmra.mxu0 %v319
      %v639 = vpop.f32.mrf.mxu0
      %v640 = vadd.f32 0.0, %v639
      %641 = vmatmul.f32.gmra.mxu0 %v322
      %v642 = vpop.f32.mrf.mxu0
      %v643 = vadd.f32 0.0, %v642
      %644 = vmatmul.f32.gmra.mxu0 %v325
      %v645 = vpop.f32.mrf.mxu0
      %v646 = vadd.f32 0.0, %v645
      %647 = vmatmul.f32.gmra.mxu0 %v328
      %v648 = vpop.f32.mrf.mxu0
      %v649 = vadd.f32 0.0, %v648
      %650 = vmatmul.f32.gmra.mxu0 %v331
      %v651 = vpop.f32.mrf.mxu0
      %v652 = vadd.f32 0.0, %v651
      %653 = vmatmul.f32.gmra.mxu0 %v334
      %v654 = vpop.f32.mrf.mxu0
      %v655 = vadd.f32 0.0, %v654
      %656 = vmatmul.f32.gmra.mxu0 %v337
      %v657 = vpop.f32.mrf.mxu0
      %v658 = vadd.f32 0.0, %v657
      %659 = vmatmul.f32.gmra.mxu0 %v340
      %v660 = vpop.f32.mrf.mxu0
      %v661 = vadd.f32 0.0, %v660
      %662 = vmatmul.f32.gmra.mxu0 %v343
      %v663 = vpop.f32.mrf.mxu0
      %v664 = vadd.f32 0.0, %v663
      %665 = vmatmul.f32.gmra.mxu0 %v346
      %v666 = vpop.f32.mrf.mxu0
      %v667 = vadd.f32 0.0, %v666
      %668 = vmatmul.f32.gmra.mxu0 %v349
      %v669 = vpop.f32.mrf.mxu0
      %v670 = vadd.f32 0.0, %v669
      %671 = vmatmul.f32.gmra.mxu0 %v352
      %v672 = vpop.f32.mrf.mxu0
      %v673 = vadd.f32 0.0, %v672
      %674 = vmatmul.f32.gmra.mxu0 %v355
      %v675 = vpop.f32.mrf.mxu0
      %v676 = vadd.f32 0.0, %v675
      %677 = vmatmul.f32.gmra.mxu0 %v358
      %v678 = vpop.f32.mrf.mxu0
      %v679 = vadd.f32 0.0, %v678
      %680 = vmatmul.f32.gmra.mxu0 %v361
      %v681 = vpop.f32.mrf.mxu0
      %v682 = vadd.f32 0.0, %v681
      %683 = vmatmul.f32.gmra.mxu0 %v364
      %v684 = vpop.f32.mrf.mxu0
      %v685 = vadd.f32 0.0, %v684
      %686 = vmatmul.f32.gmra.mxu0 %v367
      %v687 = vpop.f32.mrf.mxu0
      %v688 = vadd.f32 0.0, %v687
      %689 = vmatmul.f32.gmra.mxu0 %v370
      %v690 = vpop.f32.mrf.mxu0
      %v691 = vadd.f32 0.0, %v690
      %692 = vmatmul.f32.gmra.mxu0 %v373
      %v693 = vpop.f32.mrf.mxu0
      %v694 = vadd.f32 0.0, %v693
      %695 = vmatmul.f32.gmra.mxu0 %v376
      %v696 = vpop.f32.mrf.mxu0
      %v697 = vadd.f32 0.0, %v696
      %698 = vmatmul.f32.gmra.mxu0 %v379
      %v699 = vpop.f32.mrf.mxu0
      %v700 = vadd.f32 0.0, %v699
      %701 = vmatmul.f32.gmra.mxu0 %v382
      %v702 = vpop.f32.mrf.mxu0
      %v703 = vadd.f32 0.0, %v702
      %704 = vmatmul.f32.gmra.mxu0 %v385
      %v705 = vpop.f32.mrf.mxu0
      %v706 = vadd.f32 0.0, %v705
      %707 = vmatmul.f32.gmra.mxu0 %v388
      %v708 = vpop.f32.mrf.mxu0
      %v709 = vadd.f32 0.0, %v708
      %710 = vmatmul.f32.gmra.mxu0 %v391
      %v711 = vpop.f32.mrf.mxu0
      %v712 = vadd.f32 0.0, %v711
      %713 = vmatmul.f32.gmra.mxu0 %v394
      %v714 = vpop.f32.mrf.mxu0
      %v715 = vadd.f32 0.0, %v714
      %716 = vmatmul.f32.gmra.mxu0 %v397
      %v717 = vpop.f32.mrf.mxu0
      %v718 = vadd.f32 0.0, %v717
      %719 = vmatmul.f32.gmra.mxu0 %v400
      %v720 = vpop.f32.mrf.mxu0
      %v721 = vadd.f32 0.0, %v720
      %722 = vmatmul.f32.gmra.mxu0 %v403
      %v723 = vpop.f32.mrf.mxu0
      %v724 = vadd.f32 0.0, %v723
      %725 = vmatmul.f32.gmra.mxu0 %v406
      %v726 = vpop.f32.mrf.mxu0
      %v727 = vadd.f32 0.0, %v726
      %728 = vmatmul.f32.gmra.mxu0 %v409
      %v729 = vpop.f32.mrf.mxu0
      %v730 = vadd.f32 0.0, %v729
      %731 = vmatmul.f32.gmra.mxu0 %v412
      %v732 = vpop.f32.mrf.mxu0
      %v733 = vadd.f32 0.0, %v732
      %734 = vmatmul.f32.gmra.mxu0 %v415
      %v735 = vpop.f32.mrf.mxu0
      %v736 = vadd.f32 0.0, %v735
      %737 = vmatmul.f32.gmra.mxu0 %v418
      %v738 = vpop.f32.mrf.mxu0
      %v739 = vadd.f32 0.0, %v738
      %740 = vmatmul.f32.gmra.mxu0 %v421
      %v741 = vpop.f32.mrf.mxu0
      %v742 = vadd.f32 0.0, %v741
      %743 = vmatmul.f32.gmra.mxu0 %v424
      %v744 = vpop.f32.mrf.mxu0
      %v745 = vadd.f32 0.0, %v744
      %746 = vmatmul.f32.gmra.mxu0 %v427
      %v747 = vpop.f32.mrf.mxu0
      %v748 = vadd.f32 0.0, %v747
      %749 = vmatmul.f32.gmra.mxu0 %v430
      %v750 = vpop.f32.mrf.mxu0
      %v751 = vadd.f32 0.0, %v750
      %752 = vmatmul.f32.gmra.mxu0 %v433
      %v753 = vpop.f32.mrf.mxu0
      %v754 = vadd.f32 0.0, %v753
      %755 = vmatmul.f32.gmra.mxu0 %v436
      %v756 = vpop.f32.mrf.mxu0
      %v757 = vadd.f32 0.0, %v756
      %758 = vmatmul.f32.gmra.mxu0 %v439
      %v759 = vpop.f32.mrf.mxu0
      %v760 = vadd.f32 0.0, %v759
      %761 = vmatmul.f32.gmra.mxu0 %v442
      %v762 = vpop.f32.mrf.mxu0
      %v763 = vadd.f32 0.0, %v762
      %764 = vmatmul.f32.gmra.mxu0 %v445
      %v765 = vpop.f32.mrf.mxu0
      %v766 = vadd.f32 0.0, %v765
      %767 = vmatmul.f32.gmra.mxu0 %v448
      %v768 = vpop.f32.mrf.mxu0
      %v769 = vadd.f32 0.0, %v768
      %770 = vmatmul.f32.gmra.mxu0 %v451
      %v771 = vpop.f32.mrf.mxu0
      %v772 = vadd.f32 0.0, %v771
      %773 = vmatmul.f32.gmra.mxu0 %v454
      %v774 = vpop.f32.mrf.mxu0
      %v775 = vadd.f32 0.0, %v774
      %776 = vmatmul.f32.gmra.mxu0 %v457
      %v777 = vpop.f32.mrf.mxu0
      %v778 = vadd.f32 0.0, %v777
      %779 = vmatmul.f32.gmra.mxu0 %v460
      %v780 = vpop.f32.mrf.mxu0
      %v781 = vadd.f32 0.0, %v780
      %782 = vmatmul.f32.gmra.mxu0 %v463
      %v783 = vpop.f32.mrf.mxu0
      %v784 = vadd.f32 0.0, %v783
      %785 = vmatmul.f32.gmra.mxu0 %v466
      %v786 = vpop.f32.mrf.mxu0
      %v787 = vadd.f32 0.0, %v786
      %788 = vmatmul.f32.gmra.mxu0 %v469
      %v789 = vpop.f32.mrf.mxu0
      %v790 = vadd.f32 0.0, %v789
      %791 = vmatmul.f32.gmra.mxu0 %v472
      %v792 = vpop.f32.mrf.mxu0
      %v793 = vadd.f32 0.0, %v792
      %794 = vmatmul.f32.gmra.mxu0 %v475
      %v795 = vpop.f32.mrf.mxu0
      %v796 = vadd.f32 0.0, %v795
      %797 = vmatmul.f32.gmra.mxu0 %v478
      %v798 = vpop.f32.mrf.mxu0
      %v799 = vadd.f32 0.0, %v798
      %800 = vmatmul.f32.gmra.mxu0 %v481
      %v801 = vpop.f32.mrf.mxu0
      %v802 = vadd.f32 0.0, %v801
      %803 = vmatmul.f32.gmra.mxu0 %v484
      %v804 = vpop.f32.mrf.mxu0
      %v805 = vadd.f32 0.0, %v804
      %806 = vmatmul.f32.gmra.mxu0 %v487
      %v807 = vpop.f32.mrf.mxu0
      %v808 = vadd.f32 0.0, %v807
      %809 = vmatmul.f32.gmra.mxu0 %v490
      %v810 = vpop.f32.mrf.mxu0
      %v811 = vadd.f32 0.0, %v810
      %812 = vmatmul.f32.gmra.mxu0 %v493
      %v813 = vpop.f32.mrf.mxu0
      %v814 = vadd.f32 0.0, %v813
      %815 = vmatmul.f32.gmra.mxu0 %v496
      %v816 = vpop.f32.mrf.mxu0
      %v817 = vadd.f32 0.0, %v816
      %818 = vmatmul.f32.gmra.mxu0 %v499
      %v819 = vpop.f32.mrf.mxu0
      %v820 = vadd.f32 0.0, %v819
      %821 = vmatmul.f32.gmra.mxu0 %v502
      %v822 = vpop.f32.mrf.mxu0
      %v823 = vadd.f32 0.0, %v822
      %824 = vmatmul.f32.gmra.mxu0 %v505
      %v825 = vpop.f32.mrf.mxu0
      %v826 = vadd.f32 0.0, %v825
      %827 = vmatmul.f32.gmra.mxu0 %v508
      %v828 = vpop.f32.mrf.mxu0
      %v829 = vadd.f32 0.0, %v828
      %830 = vmatmul.f32.gmra.mxu0 %v511
      %v831 = vpop.f32.mrf.mxu0
      %v832 = vadd.f32 0.0, %v831
      %833 = vmatmul.f32.gmra.mxu0 %v514
      %v834 = vpop.f32.mrf.mxu0
      %v835 = vadd.f32 0.0, %v834
      %836 = vmatmul.f32.gmra.mxu0 %v517
      %v837 = vpop.f32.mrf.mxu0
      %v838 = vadd.f32 0.0, %v837
      %839 = vmatmul.f32.gmra.mxu0 %v520
      %v840 = vpop.f32.mrf.mxu0
      %v841 = vadd.f32 0.0, %v840
      %842 = vmatmul.f32.gmra.mxu0 %v523
      %v843 = vpop.f32.mrf.mxu0
      %v844 = vadd.f32 0.0, %v843
      %845 = vmatmul.f32.gmra.mxu0 %v526
      %v846 = vpop.f32.mrf.mxu0
      %v847 = vadd.f32 0.0, %v846
      %848 = vmatmul.f32.gmra.mxu0 %v529
      %v849 = vpop.f32.mrf.mxu0
      %v850 = vadd.f32 0.0, %v849
      %851 = vmatmul.f32.gmra.mxu0 %v532
      %v852 = vpop.f32.mrf.mxu0
      %v853 = vadd.f32 0.0, %v852
      %854 = vmatmul.f32.gmra.mxu0 %v535
      %v855 = vpop.f32.mrf.mxu0
      %v856 = vadd.f32 0.0, %v855
      %857 = vmatmul.f32.gmra.mxu0 %v538
      %v858 = vpop.f32.mrf.mxu0
      %v859 = vadd.f32 0.0, %v858
      %860 = vmatmul.f32.gmra.mxu0 %v541
      %v861 = vpop.f32.mrf.mxu0
      %v862 = vadd.f32 0.0, %v861
      %863 = vmatmul.f32.gmra.mxu0 %v544
      %v864 = vpop.f32.mrf.mxu0
      %v865 = vadd.f32 0.0, %v864
      %866 = vmatmul.f32.gmra.mxu0 %v547
      %v867 = vpop.f32.mrf.mxu0
      %v868 = vadd.f32 0.0, %v867
      %869 = vmatmul.f32.gmra.mxu0 %v550
      %v870 = vpop.f32.mrf.mxu0
      %v871 = vadd.f32 0.0, %v870
      %872 = vmatmul.f32.gmra.mxu0 %v553
      %v873 = vpop.f32.mrf.mxu0
      %v874 = vadd.f32 0.0, %v873
      %875 = vmatmul.f32.gmra.mxu0 %v556
      %v876 = vpop.f32.mrf.mxu0
      %v877 = vadd.f32 0.0, %v876
      %878 = vmatmul.f32.gmra.mxu0 %v559
      %v879 = vpop.f32.mrf.mxu0
      %v880 = vadd.f32 0.0, %v879
      %881 = vmatmul.f32.gmra.mxu0 %v562
      %v882 = vpop.f32.mrf.mxu0
      %v883 = vadd.f32 0.0, %v882
      %884 = vmatmul.f32.gmra.mxu0 %v565
      %v885 = vpop.f32.mrf.mxu0
      %v886 = vadd.f32 0.0, %v885
      %887 = vmatmul.f32.gmra.mxu0 %v568
      %v888 = vpop.f32.mrf.mxu0
      %v889 = vadd.f32 0.0, %v888
      %890 = vmatmul.f32.gmra.mxu0 %v571
      %v891 = vpop.f32.mrf.mxu0
      %v892 = vadd.f32 0.0, %v891
      %893 = vmatmul.f32.gmra.mxu0 %v574
      %v894 = vpop.f32.mrf.mxu0
      %v895 = vadd.f32 0.0, %v894
      %896 = vdwg.mxu0
      %vm897 = vcmask 130048
      %v898 = vsel %vm897, %v598, -inf
      %v899 = vsel %vm897, %v673, -inf
      %v900 = vmax.f32 %v898, %v899
      %v901 = vsel %vm897, %v748, -inf
      %v902 = vmax.f32 %v900, %v901
      %v903 = vsel %vm897, %v823, -inf
      %v904 = vmax.f32 %v902, %v903
      %v905 = vsel %vm897, %v601, -inf
      %v906 = vsel %vm897, %v676, -inf
      %v907 = vmax.f32 %v905, %v906
      %v908 = vsel %vm897, %v751, -inf
      %v909 = vmax.f32 %v907, %v908
      %v910 = vsel %vm897, %v826, -inf
      %v911 = vmax.f32 %v909, %v910
      %v912 = vsel %vm897, %v604, -inf
      %v913 = vsel %vm897, %v679, -inf
      %v914 = vmax.f32 %v912, %v913
      %v915 = vsel %vm897, %v754, -inf
      %v916 = vmax.f32 %v914, %v915
      %v917 = vsel %vm897, %v829, -inf
      %v918 = vmax.f32 %v916, %v917
      %v919 = vsel %vm897, %v607, -inf
      %v920 = vsel %vm897, %v682, -inf
      %v921 = vmax.f32 %v919, %v920
      %v922 = vsel %vm897, %v757, -inf
      %v923 = vmax.f32 %v921, %v922
      %v924 = vsel %vm897, %v832, -inf
      %v925 = vmax.f32 %v923, %v924
      %v926 = vsel %vm897, %v610, -inf
      %v927 = vsel %vm897, %v685, -inf
      %v928 = vmax.f32 %v926, %v927
      %v929 = vsel %vm897, %v760, -inf
      %v930 = vmax.f32 %v928, %v929
      %v931 = vsel %vm897, %v835, -inf
      %v932 = vmax.f32 %v930, %v931
      %v933 = vsel %vm897, %v613, -inf
      %v934 = vsel %vm897, %v688, -inf
      %v935 = vmax.f32 %v933, %v934
      %v936 = vsel %vm897, %v763, -inf
      %v937 = vmax.f32 %v935, %v936
      %v938 = vsel %vm897, %v838, -inf
      %v939 = vmax.f32 %v937, %v938
      %v940 = vsel %vm897, %v616, -inf
      %v941 = vsel %vm897, %v691, -inf
      %v942 = vmax.f32 %v940, %v941
      %v943 = vsel %vm897, %v766, -inf
      %v944 = vmax.f32 %v942, %v943
      %v945 = vsel %vm897, %v841, -inf
      %v946 = vmax.f32 %v944, %v945
      %v947 = vsel %vm897, %v619, -inf
      %v948 = vsel %vm897, %v694, -inf
      %v949 = vmax.f32 %v947, %v948
      %v950 = vsel %vm897, %v769, -inf
      %v951 = vmax.f32 %v949, %v950
      %v952 = vsel %vm897, %v844, -inf
      %v953 = vmax.f32 %v951, %v952
      %v954 = vsel %vm897, %v622, -inf
      %v955 = vsel %vm897, %v697, -inf
      %v956 = vmax.f32 %v954, %v955
      %v957 = vsel %vm897, %v772, -inf
      %v958 = vmax.f32 %v956, %v957
      %v959 = vsel %vm897, %v847, -inf
      %v960 = vmax.f32 %v958, %v959
      %v961 = vsel %vm897, %v625, -inf
      %v962 = vsel %vm897, %v700, -inf
      %v963 = vmax.f32 %v961, %v962
      %v964 = vsel %vm897, %v775, -inf
      %v965 = vmax.f32 %v963, %v964
      %v966 = vsel %vm897, %v850, -inf
      %v967 = vmax.f32 %v965, %v966
      %v968 = vsel %vm897, %v628, -inf
      %v969 = vsel %vm897, %v703, -inf
      %v970 = vmax.f32 %v968, %v969
      %v971 = vsel %vm897, %v778, -inf
      %v972 = vmax.f32 %v970, %v971
      %v973 = vsel %vm897, %v853, -inf
      %v974 = vmax.f32 %v972, %v973
      %v975 = vsel %vm897, %v631, -inf
      %v976 = vsel %vm897, %v706, -inf
      %v977 = vmax.f32 %v975, %v976
      %v978 = vsel %vm897, %v781, -inf
      %v979 = vmax.f32 %v977, %v978
      %v980 = vsel %vm897, %v856, -inf
      %v981 = vmax.f32 %v979, %v980
      %v982 = vsel %vm897, %v634, -inf
      %v983 = vsel %vm897, %v709, -inf
      %v984 = vmax.f32 %v982, %v983
      %v985 = vsel %vm897, %v784, -inf
      %v986 = vmax.f32 %v984, %v985
      %v987 = vsel %vm897, %v859, -inf
      %v988 = vmax.f32 %v986, %v987
      %v989 = vsel %vm897, %v637, -inf
      %v990 = vsel %vm897, %v712, -inf
      %v991 = vmax.f32 %v989, %v990
      %v992 = vsel %vm897, %v787, -inf
      %v993 = vmax.f32 %v991, %v992
      %v994 = vsel %vm897, %v862, -inf
      %v995 = vmax.f32 %v993, %v994
      %v996 = vsel %vm897, %v640, -inf
      %v997 = vsel %vm897, %v715, -inf
      %v998 = vmax.f32 %v996, %v997
      %v999 = vsel %vm897, %v790, -inf
      %v1000 = vmax.f32 %v998, %v999
      %v1001 = vsel %vm897, %v865, -inf
      %v1002 = vmax.f32 %v1000, %v1001
      %v1003 = vsel %vm897, %v643, -inf
      %v1004 = vsel %vm897, %v718, -inf
      %v1005 = vmax.f32 %v1003, %v1004
      %v1006 = vsel %vm897, %v793, -inf
      %v1007 = vmax.f32 %v1005, %v1006
      %v1008 = vsel %vm897, %v868, -inf
      %v1009 = vmax.f32 %v1007, %v1008
      %v1010 = vsel %vm897, %v646, -inf
      %v1011 = vsel %vm897, %v721, -inf
      %v1012 = vmax.f32 %v1010, %v1011
      %v1013 = vsel %vm897, %v796, -inf
      %v1014 = vmax.f32 %v1012, %v1013
      %v1015 = vsel %vm897, %v871, -inf
      %v1016 = vmax.f32 %v1014, %v1015
      %v1017 = vsel %vm897, %v649, -inf
      %v1018 = vsel %vm897, %v724, -inf
      %v1019 = vmax.f32 %v1017, %v1018
      %v1020 = vsel %vm897, %v799, -inf
      %v1021 = vmax.f32 %v1019, %v1020
      %v1022 = vsel %vm897, %v874, -inf
      %v1023 = vmax.f32 %v1021, %v1022
      %v1024 = vsel %vm897, %v652, -inf
      %v1025 = vsel %vm897, %v727, -inf
      %v1026 = vmax.f32 %v1024, %v1025
      %v1027 = vsel %vm897, %v802, -inf
      %v1028 = vmax.f32 %v1026, %v1027
      %v1029 = vsel %vm897, %v877, -inf
      %v1030 = vmax.f32 %v1028, %v1029
      %v1031 = vsel %vm897, %v655, -inf
      %v1032 = vsel %vm897, %v730, -inf
      %v1033 = vmax.f32 %v1031, %v1032
      %v1034 = vsel %vm897, %v805, -inf
      %v1035 = vmax.f32 %v1033, %v1034
      %v1036 = vsel %vm897, %v880, -inf
      %v1037 = vmax.f32 %v1035, %v1036
      %v1038 = vsel %vm897, %v658, -inf
      %v1039 = vsel %vm897, %v733, -inf
      %v1040 = vmax.f32 %v1038, %v1039
      %v1041 = vsel %vm897, %v808, -inf
      %v1042 = vmax.f32 %v1040, %v1041
      %v1043 = vsel %vm897, %v883, -inf
      %v1044 = vmax.f32 %v1042, %v1043
      %v1045 = vsel %vm897, %v661, -inf
      %v1046 = vsel %vm897, %v736, -inf
      %v1047 = vmax.f32 %v1045, %v1046
      %v1048 = vsel %vm897, %v811, -inf
      %v1049 = vmax.f32 %v1047, %v1048
      %v1050 = vsel %vm897, %v886, -inf
      %v1051 = vmax.f32 %v1049, %v1050
      %v1052 = vsel %vm897, %v664, -inf
      %v1053 = vsel %vm897, %v739, -inf
      %v1054 = vmax.f32 %v1052, %v1053
      %v1055 = vsel %vm897, %v814, -inf
      %v1056 = vmax.f32 %v1054, %v1055
      %v1057 = vsel %vm897, %v889, -inf
      %v1058 = vmax.f32 %v1056, %v1057
      %v1059 = vsel %vm897, %v667, -inf
      %v1060 = vsel %vm897, %v742, -inf
      %v1061 = vmax.f32 %v1059, %v1060
      %v1062 = vsel %vm897, %v817, -inf
      %v1063 = vmax.f32 %v1061, %v1062
      %v1064 = vsel %vm897, %v892, -inf
      %v1065 = vmax.f32 %v1063, %v1064
      %v1066 = vsel %vm897, %v670, -inf
      %v1067 = vsel %vm897, %v745, -inf
      %v1068 = vmax.f32 %v1066, %v1067
      %v1069 = vsel %vm897, %v820, -inf
      %v1070 = vmax.f32 %v1068, %v1069
      %v1071 = vsel %vm897, %v895, -inf
      %v1072 = vmax.f32 %v1070, %v1071
      %v1073 = vld [vmem:[%s2] sm:$0x1]
      %v1075 = vperm.slane %v1073, 0
      %v1077 = vadd.f32 %v904, %v1075
      %v1078 = vadd.f32 %v911, %v1075
      %v1079 = vadd.f32 %v918, %v1075
      %v1080 = vadd.f32 %v925, %v1075
      %v1081 = vadd.f32 %v932, %v1075
      %v1082 = vadd.f32 %v939, %v1075
      %v1083 = vadd.f32 %v946, %v1075
      %v1084 = vadd.f32 %v953, %v1075
      %v1085 = vadd.f32 %v960, %v1075
      %v1086 = vadd.f32 %v967, %v1075
      %v1087 = vadd.f32 %v974, %v1075
      %v1088 = vadd.f32 %v981, %v1075
      %v1089 = vadd.f32 %v988, %v1075
      %v1090 = vadd.f32 %v995, %v1075
      %v1091 = vadd.f32 %v1002, %v1075
      %v1092 = vadd.f32 %v1009, %v1075
      %v1093 = vadd.f32 %v1016, %v1075
      %v1094 = vadd.f32 %v1023, %v1075
      %v1095 = vadd.f32 %v1030, %v1075
      %v1096 = vadd.f32 %v1037, %v1075
      %v1097 = vadd.f32 %v1044, %v1075
      %v1098 = vadd.f32 %v1051, %v1075
      %v1099 = vadd.f32 %v1058, %v1075
      %v1100 = vadd.f32 %v1065, %v1075
      %v1101 = vadd.f32 %v1072, %v1075
      %v1102 = vmax.f32 %v1077, 0.0
      %v1103 = vmax.f32 %v1078, 0.0
      %v1104 = vmax.f32 %v1079, 0.0
      %v1105 = vmax.f32 %v1080, 0.0
      %v1106 = vmax.f32 %v1081, 0.0
      %v1107 = vmax.f32 %v1082, 0.0
      %v1108 = vmax.f32 %v1083, 0.0
      %v1109 = vmax.f32 %v1084, 0.0
      %v1110 = vmax.f32 %v1085, 0.0
      %v1111 = vmax.f32 %v1086, 0.0
      %v1112 = vmax.f32 %v1087, 0.0
      %v1113 = vmax.f32 %v1088, 0.0
      %v1114 = vmax.f32 %v1089, 0.0
      %v1115 = vmax.f32 %v1090, 0.0
      %v1116 = vmax.f32 %v1091, 0.0
      %v1117 = vmax.f32 %v1092, 0.0
      %v1118 = vmax.f32 %v1093, 0.0
      %v1119 = vmax.f32 %v1094, 0.0
      %v1120 = vmax.f32 %v1095, 0.0
      %v1121 = vmax.f32 %v1096, 0.0
      %v1122 = vmax.f32 %v1097, 0.0
      %v1123 = vmax.f32 %v1098, 0.0
      %v1124 = vmax.f32 %v1099, 0.0
      %v1125 = vmax.f32 %v1100, 0.0
      %v1126 = vmax.f32 %v1101, 0.0
      %1127 = vst.msk [vmem:[%s170] sm:$0xff] %vm897, %v1102
      %1128 = vst.msk [vmem:[%s170 + $0x8] sm:$0xff] %vm897, %v1103
      %1129 = vst.msk [vmem:[%s170 + $0x10] sm:$0xff] %vm897, %v1104
      %1130 = vst.msk [vmem:[%s170 + $0x18] sm:$0xff] %vm897, %v1105
      %1131 = vst.msk [vmem:[%s170 + $0x20] sm:$0xff] %vm897, %v1106
      %1132 = vst.msk [vmem:[%s170 + $0x28] sm:$0xff] %vm897, %v1107
      %1133 = vst.msk [vmem:[%s170 + $0x30] sm:$0xff] %vm897, %v1108
      %1134 = vst.msk [vmem:[%s170 + $0x38] sm:$0xff] %vm897, %v1109
      %1135 = vst.msk [vmem:[%s170 + $0x40] sm:$0xff] %vm897, %v1110
      %1136 = vst.msk [vmem:[%s170 + $0x48] sm:$0xff] %vm897, %v1111
      %1137 = vst.msk [vmem:[%s170 + $0x50] sm:$0xff] %vm897, %v1112
      %1138 = vst.msk [vmem:[%s170 + $0x58] sm:$0xff] %vm897, %v1113
      %1139 = vst.msk [vmem:[%s170 + $0x60] sm:$0xff] %vm897, %v1114
      %1140 = vst.msk [vmem:[%s170 + $0x68] sm:$0xff] %vm897, %v1115
      %1141 = vst.msk [vmem:[%s170 + $0x70] sm:$0xff] %vm897, %v1116
      %1142 = vst.msk [vmem:[%s170 + $0x78] sm:$0xff] %vm897, %v1117
      %1143 = vst.msk [vmem:[%s170 + $0x80] sm:$0xff] %vm897, %v1118
      %1144 = vst.msk [vmem:[%s170 + $0x88] sm:$0xff] %vm897, %v1119
      %1145 = vst.msk [vmem:[%s170 + $0x90] sm:$0xff] %vm897, %v1120
      %1146 = vst.msk [vmem:[%s170 + $0x98] sm:$0xff] %vm897, %v1121
      %1147 = vst.msk [vmem:[%s170 + $0xa0] sm:$0xff] %vm897, %v1122
      %1148 = vst.msk [vmem:[%s170 + $0xa8] sm:$0xff] %vm897, %v1123
      %1149 = vst.msk [vmem:[%s170 + $0xb0] sm:$0xff] %vm897, %v1124
      %1150 = vst.msk [vmem:[%s170 + $0xb8] sm:$0xff] %vm897, %v1125
      %1151 = vst.msk [vmem:[%s170 + $0xc0] sm:$0xff] %vm897, %v1126
      %p1152 = scmp.lt.s32.totalorder %s14, 1
      %s1153 = scalar_select %p1152, %s14, 1
      %s1154 = smul.addr %s1153, 25
      %s1155 = smul.addr %s1154, 8
      %s1156 = scalar_lea.vmem %s3, %s1155
      // Predicated region
      $region33: #{cnn_forward.3} parent=31 // pred_check
        %p1157 = pneg %p100
      $region34: #{cnn_forward.3} parent=31 // pred_check_branch
        %1159 = sbr.rel (%p1157) target = $region36
      $region35: #{cnn_forward.3} parent=31 // pred_region
        _
      $region36: #{cnn_forward.3} parent=31 // pred_fallthru
        _
    $region32: #{cnn_forward.3} parent=5 // pred_fallthru
      _
    %p1160 = scmp.le.s32.totalorder 2, %s9
    // Predicated region
    $region37: #{cnn_forward.3} parent=5 // pred_check
      %p1161 = pneg %p1160
    $region38: #{cnn_forward.3} parent=5 // pred_check_branch
      %1163 = sbr.rel (%p1161) target = $region40
    $region39: #{cnn_forward.3} parent=5 // pred_region
      %s1164 = ssub.s32 %s9, 2
      // Predicated region
      $region41: #{cnn_forward.3} parent=39 // pred_check
        %p1165 = pneg %p106
      $region42: #{cnn_forward.3} parent=39 // pred_check_branch
        %1167 = sbr.rel (%p1165) target = $region44
      $region43: #{cnn_forward.3} parent=39 // pred_region
        %p1168 = scmp.lt.s32.totalorder %s15, 1
        %s1169 = scalar_select %p1168, %s15, 1
        %s1170 = smul.addr %s1169, 25
        %s1171 = smul.addr %s1170, 8
        %s1172 = scalar_lea.vmem %s3, %s1171
      $region44: #{cnn_forward.3} parent=39 // pred_fallthru
        _
    $region40: #{cnn_forward.3} parent=5 // pred_fallthru
      _
  $region6: #{cnn_forward.3} parent=0 // loop_footer
    %s13 = sadd.s32 1, %s9
  $region7: #{cnn_forward.3} parent=0 // loop_footer_branch
    %8 = sbr.rel target = $region3
  $region8: #{cnn_forward.3} parent=0 // loop_exit
    _

// kernel: cnn_forward.4
$region0: #{cnn_forward.4}
  #allocation0 [shape = 'u32[]', space=smem, size = 0x4, offset = 0x4, fixed_abs, tag = 'smem constant byte address 0x4 - core index']
  #allocation1 [shape = 'u32[72,128]{1,0:T(1,128)}', space=vmem, size = 0x9000, scoped, tag = 'internal scratch']
  %s0 = inlined_call_operand.vmem [shape: f32[2,4,56,400], index: 0, kind: input, shape index: {}]
  %s1 = inlined_call_operand.vmem [shape: f32[400,32], index: 1, kind: input, shape index: {}]
  %s2 = inlined_call_operand.vmem [shape: f32[1,1,32], index: 2, kind: input, shape index: {}]
  %s3 = inlined_call_operand.vmem [shape: f32[2,56,32], index: 3, kind: output, shape index: {}]
  %s4 = sld [smem:[#allocation0]]
  $region45: #{cnn_forward.4} parent=0
    _
  %s6 = ssub.s32 1, %s4
  %s7 = scalar_select 0, %s6, %s4
  loop: start=0, step=1, limit=4
  $region2: #{cnn_forward.4} parent=0 // loop_pre_header
    _
  $region3: #{cnn_forward.4} parent=0 // loop_header
    %s9 = sphi 0, %s13
    %p10 = scmp.ge.s32.totalorder %s9, 4
    %s19 = sphi 0, %s21
    %s22 = sphi 0, %s19
    %s23 = sphi 0, %s22
    %s39 = sphi 0, %s23
    %s43 = sphi 0, %s43
    %s45 = sphi 0, %s43
    %s46 = sphi 0, %s45
    %s60 = sphi 0, %s46
    %s64 = sphi 0, %s64
    %s66 = sphi 0, %s64
    %s67 = sphi 0, %s66
    %s81 = sphi 0, %s67
    %s87 = sphi 0, %s89
    %s90 = sphi 0, %s87
    %s91 = sphi 0, %s90
    %s107 = sphi 0, %s91
  $region4: #{cnn_forward.4} parent=0 // loop_header_branch
    %12 = sbr.rel (%p10) target = $region8
  $region5: #{cnn_forward.4} parent=0 // loop_body
    %s14 = ssub.s32 %s9, 1
    %s15 = ssub.s32 %s9, 2
    %s16 = sadd.s32 %s9, 1
    %s17 = ssub.s32 %s9, %s16
    %p18 = scmp.eq.s32.totalorder %s17, 0
    %s20 = sadd.s32 %s19, 1
    %s21 = scalar_select %p18, %s19, %s20
    %p24 = pneg %p18
    %p25 = scmp.eq.s32.totalorder %s9, 1
    %p26 = por %p24, %p25
    %p27 = scmp.ne.s32.totalorder %s19, %s22
    %p28 = scmp.eq.s32.totalorder %s9, 0
    %p29 = por %p27, %p28
    %p30 = scmp.ne.s32.totalorder %s19, %s22
    %p31 = scmp.eq.s32.totalorder %s14, 1
    %p32 = por %p30, %p31
    %p33 = scmp.ne.s32.totalorder %s22, %s23
    %p34 = scmp.eq.s32.totalorder %s14, 0
    %p35 = por %p33, %p34
    %p36 = scmp.ne.s32.totalorder %s22, %s23
    %p37 = scmp.eq.s32.totalorder %s15, 1
    %p38 = por %p36, %p37
    %p40 = scmp.ne.s32.totalorder %s23, %s39
    %p41 = scmp.eq.s32.totalorder %s15, 0
    %p42 = por %p40, %p41
    %s44 = sadd.s32 %s43, 1
    %p47 = scmp.eq.s32.totalorder %s9, 1
    %p48 = scmp.ne.s32.totalorder %s43, %s45
    %p49 = scmp.eq.s32.totalorder %s9, 0
    %p50 = por %p48, %p49
    %p51 = scmp.ne.s32.totalorder %s43, %s45
    %p52 = scmp.eq.s32.totalorder %s14, 1
    %p53 = por %p51, %p52
    %p54 = scmp.ne.s32.totalorder %s45, %s46
    %p55 = scmp.eq.s32.totalorder %s14, 0
    %p56 = por %p54, %p55
    %p57 = scmp.ne.s32.totalorder %s45, %s46
    %p58 = scmp.eq.s32.totalorder %s15, 1
    %p59 = por %p57, %p58
    %p61 = scmp.ne.s32.totalorder %s46, %s60
    %p62 = scmp.eq.s32.totalorder %s15, 0
    %p63 = por %p61, %p62
    %s65 = sadd.s32 %s64, 1
    %p68 = scmp.eq.s32.totalorder %s9, 1
    %p69 = scmp.ne.s32.totalorder %s64, %s66
    %p70 = scmp.eq.s32.totalorder %s9, 0
    %p71 = por %p69, %p70
    %p72 = scmp.ne.s32.totalorder %s64, %s66
    %p73 = scmp.eq.s32.totalorder %s14, 1
    %p74 = por %p72, %p73
    %p75 = scmp.ne.s32.totalorder %s66, %s67
    %p76 = scmp.eq.s32.totalorder %s14, 0
    %p77 = por %p75, %p76
    %p78 = scmp.ne.s32.totalorder %s66, %s67
    %p79 = scmp.eq.s32.totalorder %s15, 1
    %p80 = por %p78, %p79
    %p82 = scmp.ne.s32.totalorder %s67, %s81
    %p83 = scmp.eq.s32.totalorder %s15, 0
    %p84 = por %p82, %p83
    %s85 = ssub.s32 %s9, %s16
    %p86 = scmp.eq.s32.totalorder %s85, 0
    %s88 = sadd.s32 %s87, 1
    %s89 = scalar_select %p86, %s87, %s88
    %p92 = pneg %p86
    %p93 = scmp.eq.s32.totalorder %s9, 1
    %p94 = por %p92, %p93
    %p95 = scmp.ne.s32.totalorder %s87, %s90
    %p96 = scmp.eq.s32.totalorder %s9, 0
    %p97 = por %p95, %p96
    %p98 = scmp.ne.s32.totalorder %s87, %s90
    %p99 = scmp.eq.s32.totalorder %s14, 1
    %p100 = por %p98, %p99
    %p101 = scmp.ne.s32.totalorder %s90, %s91
    %p102 = scmp.eq.s32.totalorder %s14, 0
    %p103 = por %p101, %p102
    %p104 = scmp.ne.s32.totalorder %s90, %s91
    %p105 = scmp.eq.s32.totalorder %s15, 1
    %p106 = por %p104, %p105
    %p108 = scmp.ne.s32.totalorder %s91, %s107
    %p109 = scmp.eq.s32.totalorder %s15, 0
    %p110 = por %p108, %p109
    %p111 = scmp.le.s32.totalorder 1, %s9
    %p112 = scmp.lt.s32.totalorder %s9, 3
    %p113 = pnand %p111, %p112
    %p114 = pneg %p113
    // Predicated region
    $region9: #{cnn_forward.4} parent=5 // pred_check
      _
    $region10: #{cnn_forward.4} parent=5 // pred_check_branch
      %116 = sbr.rel (%p113) target = $region12
    $region11: #{cnn_forward.4} parent=5 // pred_region
      %s117 = ssub.s32 %s9, 1
      // Predicated region
      $region13: #{cnn_forward.4} parent=11 // pred_check
        %p118 = pneg %p56
      $region14: #{cnn_forward.4} parent=11 // pred_check_branch
        %120 = sbr.rel (%p118) target = $region16
      $region15: #{cnn_forward.4} parent=11 // pred_region
        _
      $region16: #{cnn_forward.4} parent=11 // pred_fallthru
        _
      // Predicated region
      $region17: #{cnn_forward.4} parent=11 // pred_check
        %p121 = pneg %p77
      $region18: #{cnn_forward.4} parent=11 // pred_check_branch
        %123 = sbr.rel (%p121) target = $region20
      $region19: #{cnn_forward.4} parent=11 // pred_region
        _
      $region20: #{cnn_forward.4} parent=11 // pred_fallthru
        _
    $region12: #{cnn_forward.4} parent=5 // pred_fallthru
      _
    %p124 = scmp.lt.s32.totalorder %s9, 2
    // Predicated region
    $region21: #{cnn_forward.4} parent=5 // pred_check
      %p125 = pneg %p124
    $region22: #{cnn_forward.4} parent=5 // pred_check_branch
      %127 = sbr.rel (%p125) target = $region24
    $region23: #{cnn_forward.4} parent=5 // pred_region
      // Predicated region
      $region25: #{cnn_forward.4} parent=23 // pred_check
        %p128 = pneg %p29
      $region26: #{cnn_forward.4} parent=23 // pred_check_branch
        %130 = sbr.rel (%p128) target = $region28
      $region27: #{cnn_forward.4} parent=23 // pred_region
        %p131 = scmp.lt.s32.totalorder %s9, 1
        %s132 = scalar_select %p131, %s9, 1
        %s133 = smul.addr %s132, 112
        %s134 = smul.addr %s133, 8
        %s135 = scalar_lea.vmem %s0, %s134
      $region28: #{cnn_forward.4} parent=23 // pred_fallthru
        _
    $region24: #{cnn_forward.4} parent=5 // pred_fallthru
      _
    %p136 = scmp.le.s32.totalorder 1, %s9
    %p137 = scmp.lt.s32.totalorder %s9, 3
    %p138 = pnand %p136, %p137
    %p139 = pneg %p138
    // Predicated region
    $region29: #{cnn_forward.4} parent=5 // pred_check
      _
    $region30: #{cnn_forward.4} parent=5 // pred_check_branch
      %141 = sbr.rel (%p138) target = $region32
    $region31: #{cnn_forward.4} parent=5 // pred_region
      %s142 = ssub.s32 %s9, 1
      %p143 = scmp.lt.s32.totalorder %s14, 1
      %s144 = scalar_select %p143, %s14, 1
      %s145 = smul.addr %s144, 112
      %s146 = smul.addr %s145, 8
      %s147 = scalar_lea.vmem %s0, %s146
      %p148 = pneg %p35
      %p149 = pneg %p32
      %p150 = pneg %p56
      %p151 = pneg %p53
      %p152 = pneg %p77
      %p153 = pneg %p74
      %p154 = pneg %p103
      %p155 = pneg %p100
      %p156 = scmp.lt.s32.totalorder %s14, 1
      %s157 = scalar_select %p156, %s14, 1
      %s158 = smul.addr %s157, 7
      %s159 = smul.addr %s158, 8
      %s160 = scalar_lea.vmem %s3, %s159
      %p161 = scmp.lt.s32.totalorder %s14, 1
      %s162 = scalar_select %p161, %s14, 1
      %s163 = smul.addr %s162, 112
      %s164 = smul.addr %s163, 8
      %s165 = scalar_lea.vmem %s0, %s164
      %p166 = scmp.lt.s32.totalorder %s14, 1
      %s167 = scalar_select %p166, %s14, 1
      %s168 = smul.addr %s167, 7
      %s169 = smul.addr %s168, 8
      %s170 = scalar_lea.vmem %s3, %s169
      %v171 = vld [vmem:[%s165] sm:$0xff]
      %v172 = vld [vmem:[%s165 + $0x8] sm:$0xff]
      %v173 = vld [vmem:[%s165 + $0x10] sm:$0xff]
      %v174 = vld [vmem:[%s165 + $0x18] sm:$0xff]
      %v175 = vld [vmem:[%s165 + $0x20] sm:$0xff]
      %v176 = vld [vmem:[%s165 + $0x28] sm:$0xff]
      %v177 = vld [vmem:[%s165 + $0x30] sm:$0xff]
      %v178 = vld [vmem:[%s165 + $0x38] sm:$0xff]
      %v179 = vld [vmem:[%s165 + $0x40] sm:$0xff]
      %v180 = vld [vmem:[%s165 + $0x48] sm:$0xff]
      %v181 = vld [vmem:[%s165 + $0x50] sm:$0xff]
      %v182 = vld [vmem:[%s165 + $0x58] sm:$0xff]
      %v183 = vld [vmem:[%s165 + $0x60] sm:$0xff]
      %v184 = vld [vmem:[%s165 + $0x68] sm:$0xff]
      %v185 = vld [vmem:[%s165 + $0x70] sm:$0xff]
      %v186 = vld [vmem:[%s165 + $0x78] sm:$0xff]
      %v187 = vld [vmem:[%s165 + $0x80] sm:$0xff]
      %v188 = vld [vmem:[%s165 + $0x88] sm:$0xff]
      %v189 = vld [vmem:[%s165 + $0x90] sm:$0xff]
      %v190 = vld [vmem:[%s165 + $0x98] sm:$0xff]
      %v191 = vld [vmem:[%s165 + $0xa0] sm:$0xff]
      %v192 = vld [vmem:[%s165 + $0xa8] sm:$0xff]
      %v193 = vld [vmem:[%s165 + $0xb0] sm:$0xff]
      %v194 = vld [vmem:[%s165 + $0xb8] sm:$0xff]
      %v195 = vld [vmem:[%s165 + $0xc0] sm:$0xff]
      %v196 = vld [vmem:[%s165 + $0xc8] sm:$0xff]
      %v197 = vld [vmem:[%s165 + $0xd0] sm:$0xff]
      %v198 = vld [vmem:[%s165 + $0xd8] sm:$0xff]
      %v199 = vld [vmem:[%s165 + $0xe0] sm:$0xff]
      %v200 = vld [vmem:[%s165 + $0xe8] sm:$0xff]
      %v201 = vld [vmem:[%s165 + $0xf0] sm:$0xff]
      %v202 = vld [vmem:[%s165 + $0xf8] sm:$0xff]
      %v203 = vld [vmem:[%s165 + $0x100] sm:$0xff]
      %v204 = vld [vmem:[%s165 + $0x108] sm:$0xff]
      %v205 = vld [vmem:[%s165 + $0x110] sm:$0xff]
      %v206 = vld [vmem:[%s165 + $0x118] sm:$0xff]
      %v207 = vld [vmem:[%s165 + $0x120] sm:$0xff]
      %v208 = vld [vmem:[%s165 + $0x128] sm:$0xff]
      %v209 = vld [vmem:[%s165 + $0x130] sm:$0xff]
      %v210 = vld [vmem:[%s165 + $0x138] sm:$0xff]
      %v211 = vld [vmem:[%s165 + $0x140] sm:$0xff]
      %v212 = vld [vmem:[%s165 + $0x148] sm:$0xff]
      %v213 = vld [vmem:[%s165 + $0x150] sm:$0xff]
      %v214 = vld [vmem:[%s165 + $0x158] sm:$0xff]
      %v215 = vld [vmem:[%s165 + $0x160] sm:$0xff]
      %v216 = vld [vmem:[%s165 + $0x168] sm:$0xff]
      %v217 = vld [vmem:[%s165 + $0x170] sm:$0xff]
      %v218 = vld [vmem:[%s165 + $0x178] sm:$0xff]
      %v219 = vld [vmem:[%s165 + $0x180] sm:$0xff]
      %v220 = vld [vmem:[%s165 + $0x188] sm:$0xff]
      %v221 = vld [vmem:[%s165 + $0x190] sm:$0xff]
      %v222 = vld [vmem:[%s165 + $0x198] sm:$0xff]
      %v223 = vld [vmem:[%s165 + $0x1a0] sm:$0xff]
      %v224 = vld [vmem:[%s165 + $0x1a8] sm:$0xff]
      %v225 = vld [vmem:[%s165 + $0x1b0] sm:$0xff]
      %v226 = vld [vmem:[%s165 + $0x1b8] sm:$0xff]
      %v227 = vld [vmem:[%s165 + $0x1c0] sm:$0xff]
      %v228 = vld [vmem:[%s165 + $0x1c8] sm:$0xff]
      %v229 = vld [vmem:[%s165 + $0x1d0] sm:$0xff]
      %v230 = vld [vmem:[%s165 + $0x1d8] sm:$0xff]
      %v231 = vld [vmem:[%s165 + $0x1e0] sm:$0xff]
      %v232 = vld [vmem:[%s165 + $0x1e8] sm:$0xff]
      %v233 = vld [vmem:[%s165 + $0x1f0] sm:$0xff]
      %v234 = vld [vmem:[%s165 + $0x1f8] sm:$0xff]
      %v235 = vld [vmem:[%s165 + $0x200] sm:$0xff]
      %v236 = vld [vmem:[%s165 + $0x208] sm:$0xff]
      %v237 = vld [vmem:[%s165 + $0x210] sm:$0xff]
      %v238 = vld [vmem:[%s165 + $0x218] sm:$0xff]
      %v239 = vld [vmem:[%s165 + $0x220] sm:$0xff]
      %v240 = vld [vmem:[%s165 + $0x228] sm:$0xff]
      %v241 = vld [vmem:[%s165 + $0x230] sm:$0xff]
      %v242 = vld [vmem:[%s165 + $0x238] sm:$0xff]
      %v243 = vld [vmem:[%s165 + $0x240] sm:$0xff]
      %v244 = vld [vmem:[%s165 + $0x248] sm:$0xff]
      %v245 = vld [vmem:[%s165 + $0x250] sm:$0xff]
      %v246 = vld [vmem:[%s165 + $0x258] sm:$0xff]
      %v247 = vld [vmem:[%s165 + $0x260] sm:$0xff]
      %v248 = vld [vmem:[%s165 + $0x268] sm:$0xff]
      %v249 = vld [vmem:[%s165 + $0x270] sm:$0xff]
      %v250 = vld [vmem:[%s165 + $0x278] sm:$0xff]
      %v251 = vld [vmem:[%s165 + $0x280] sm:$0xff]
      %v252 = vld [vmem:[%s165 + $0x288] sm:$0xff]
      %v253 = vld [vmem:[%s165 + $0x290] sm:$0xff]
      %v254 = vld [vmem:[%s165 + $0x298] sm:$0xff]
      %v255 = vld [vmem:[%s165 + $0x2a0] sm:$0xff]
      %v256 = vld [vmem:[%s165 + $0x2a8] sm:$0xff]
      %v257 = vld [vmem:[%s165 + $0x2b0] sm:$0xff]
      %v258 = vld [vmem:[%s165 + $0x2b8] sm:$0xff]
      %v259 = vld [vmem:[%s165 + $0x2c0] sm:$0xff]
      %v260 = vld [vmem:[%s165 + $0x2c8] sm:$0xff]
      %v261 = vld [vmem:[%s165 + $0x2d0] sm:$0xff]
      %v262 = vld [vmem:[%s165 + $0x2d8] sm:$0xff]
      %v263 = vld [vmem:[%s165 + $0x2e0] sm:$0xff]
      %v264 = vld [vmem:[%s165 + $0x2e8] sm:$0xff]
      %v265 = vld [vmem:[%s165 + $0x2f0] sm:$0xff]
      %v266 = vld [vmem:[%s165 + $0x2f8] sm:$0xff]
      %v267 = vld [vmem:[%s165 + $0x300] sm:$0xff]
      %v268 = vld [vmem:[%s165 + $0x308] sm:$0xff]
      %v269 = vld [vmem:[%s165 + $0x310] sm:$0xff]
      %v270 = vld [vmem:[%s165 + $0x318] sm:$0xff]
      %v271 = vld [vmem:[%s165 + $0x320] sm:$0xff]
      %v272 = vld [vmem:[%s165 + $0x328] sm:$0xff]
      %v273 = vld [vmem:[%s165 + $0x330] sm:$0xff]
      %v274 = vld [vmem:[%s165 + $0x338] sm:$0xff]
      %v275 = vld [vmem:[%s165 + $0x340] sm:$0xff]
      %v276 = vld [vmem:[%s165 + $0x348] sm:$0xff]
      %v277 = vld [vmem:[%s165 + $0x350] sm:$0xff]
      %v278 = vld [vmem:[%s165 + $0x358] sm:$0xff]
      %v279 = vld [vmem:[%s165 + $0x360] sm:$0xff]
      %v280 = vld [vmem:[%s165 + $0x368] sm:$0xff]
      %v281 = vld [vmem:[%s165 + $0x370] sm:$0xff]
      %v282 = vld [vmem:[%s165 + $0x378] sm:$0xff]
      %v283 = vld [vmem:[%s1] sm:$0xff]
      %v284 = vld [vmem:[%s1 + $0x8] sm:$0xff]
      %v285 = vld [vmem:[%s1 + $0x10] sm:$0xff]
      %v286 = vld [vmem:[%s1 + $0x18] sm:$0xff]
      %v287 = vld [vmem:[%s1 + $0x20] sm:$0xff]
      %v288 = vld [vmem:[%s1 + $0x28] sm:$0xff]
      %v289 = vld [vmem:[%s1 + $0x30] sm:$0xff]
      %v290 = vld [vmem:[%s1 + $0x38] sm:$0xff]
      %v291 = vld [vmem:[%s1 + $0x40] sm:$0xff]
      %v292 = vld [vmem:[%s1 + $0x48] sm:$0xff]
      %v293 = vld [vmem:[%s1 + $0x50] sm:$0xff]
      %v294 = vld [vmem:[%s1 + $0x58] sm:$0xff]
      %v295 = vld [vmem:[%s1 + $0x60] sm:$0xff]
      %v296 = vld [vmem:[%s1 + $0x68] sm:$0xff]
      %v297 = vld [vmem:[%s1 + $0x70] sm:$0xff]
      %v298 = vld [vmem:[%s1 + $0x78] sm:$0xff]
      %v299 = vld [vmem:[%s1 + $0x80] sm:$0xff]
      %v300 = vld [vmem:[%s1 + $0x88] sm:$0xff]
      %v301 = vld [vmem:[%s1 + $0x90] sm:$0xff]
      %v302 = vld [vmem:[%s1 + $0x98] sm:$0xff]
      %v303 = vld [vmem:[%s1 + $0xa0] sm:$0xff]
      %v304 = vld [vmem:[%s1 + $0xa8] sm:$0xff]
      %v305 = vld [vmem:[%s1 + $0xb0] sm:$0xff]
      %v306 = vld [vmem:[%s1 + $0xb8] sm:$0xff]
      %v307 = vld [vmem:[%s1 + $0xc0] sm:$0xff]
      %v308 = vld [vmem:[%s1 + $0xc8] sm:$0xff]
      %v309 = vld [vmem:[%s1 + $0xd0] sm:$0xff]
      %v310 = vld [vmem:[%s1 + $0xd8] sm:$0xff]
      %v311 = vld [vmem:[%s1 + $0xe0] sm:$0xff]
      %v312 = vld [vmem:[%s1 + $0xe8] sm:$0xff]
      %v313 = vld [vmem:[%s1 + $0xf0] sm:$0xff]
      %v314 = vld [vmem:[%s1 + $0xf8] sm:$0xff]
      %v315 = vld [vmem:[%s1 + $0x100] sm:$0xff]
      %v316 = vld [vmem:[%s1 + $0x108] sm:$0xff]
      %v317 = vld [vmem:[%s1 + $0x110] sm:$0xff]
      %v318 = vld [vmem:[%s1 + $0x118] sm:$0xff]
      %v319 = vld [vmem:[%s1 + $0x120] sm:$0xff]
      %v320 = vld [vmem:[%s1 + $0x128] sm:$0xff]
      %v321 = vld [vmem:[%s1 + $0x130] sm:$0xff]
      %v322 = vld [vmem:[%s1 + $0x138] sm:$0xff]
      %v323 = vld [vmem:[%s1 + $0x140] sm:$0xff]
      %v324 = vld [vmem:[%s1 + $0x148] sm:$0xff]
      %v325 = vld [vmem:[%s1 + $0x150] sm:$0xff]
      %v326 = vld [vmem:[%s1 + $0x158] sm:$0xff]
      %v327 = vld [vmem:[%s1 + $0x160] sm:$0xff]
      %v328 = vld [vmem:[%s1 + $0x168] sm:$0xff]
      %v329 = vld [vmem:[%s1 + $0x170] sm:$0xff]
      %v330 = vld [vmem:[%s1 + $0x178] sm:$0xff]
      %v331 = vld [vmem:[%s1 + $0x180] sm:$0xff]
      %v332 = vld [vmem:[%s1 + $0x188] sm:$0xff]
      %vm333 = vcmask 130048
      %v335 = vsel %vm333, %v174, 0
      %v338 = vsel %vm333, %v178, 0
      %v341 = vsel %vm333, %v182, 0
      %v344 = vsel %vm333, %v186, 0
      %v347 = vsel %vm333, %v190, 0
      %v350 = vsel %vm333, %v194, 0
      %v353 = vsel %vm333, %v198, 0
      %v356 = vsel %vm333, %v202, 0
      %v359 = vsel %vm333, %v206, 0
      %v362 = vsel %vm333, %v210, 0
      %v365 = vsel %vm333, %v214, 0
      %v368 = vsel %vm333, %v218, 0
      %v371 = vsel %vm333, %v222, 0
      %v374 = vsel %vm333, %v226, 0
      %v377 = vsel %vm333, %v230, 0
      %v380 = vsel %vm333, %v234, 0
      %v383 = vsel %vm333, %v238, 0
      %v386 = vsel %vm333, %v242, 0
      %v389 = vsel %vm333, %v246, 0
      %v392 = vsel %vm333, %v250, 0
      %v395 = vsel %vm333, %v254, 0
      %v398 = vsel %vm333, %v258, 0
      %v401 = vsel %vm333, %v262, 0
      %v404 = vsel %vm333, %v266, 0
      %v407 = vsel %vm333, %v270, 0
      %v410 = vsel %vm333, %v274, 0
      %v413 = vsel %vm333, %v278, 0
      %v416 = vsel %vm333, %v282, 0
      %418 = vmatpush.msra.mxu0 %v298
      %419 = vmatpush.msra.mxu0 %v297
      %420 = vmatpush.msra.mxu0 %v296
      %421 = vmatpush.msra.mxu0 %v295
      %422 = vmatpush.msra.mxu0 %v294
      %423 = vmatpush.msra.mxu0 %v293
      %424 = vmatpush.msra.mxu0 %v292
      %425 = vmatpush.msra.mxu0 %v291
      %426 = vmatpush.msra.mxu0 %v290
      %427 = vmatpush.msra.mxu0 %v289
      %428 = vmatpush.msra.mxu0 %v288
      %429 = vmatpush.msra.mxu0 %v287
      %430 = vmatpush.msra.mxu0 %v286
      %431 = vmatpush.msra.mxu0 %v285
      %432 = vmatpush.msra.mxu0 %v284
      %433 = vmatpush.msra.mxu0 %v283
      %434 = vmatmul.f32.gmra.mxu0 %v171
      %v435 = vpop.f32.mrf.mxu0
      %v436 = vadd.f32 0.0, %v435
      %437 = vmatmul.f32.gmra.mxu0 %v175
      %v438 = vpop.f32.mrf.mxu0
      %v439 = vadd.f32 0.0, %v438
      %440 = vmatmul.f32.gmra.mxu0 %v179
      %v441 = vpop.f32.mrf.mxu0
      %v442 = vadd.f32 0.0, %v441
      %443 = vmatmul.f32.gmra.mxu0 %v183
      %v444 = vpop.f32.mrf.mxu0
      %v445 = vadd.f32 0.0, %v444
      %446 = vmatmul.f32.gmra.mxu0 %v187
      %v447 = vpop.f32.mrf.mxu0
      %v448 = vadd.f32 0.0, %v447
      %449 = vmatmul.f32.gmra.mxu0 %v191
      %v450 = vpop.f32.mrf.mxu0
      %v451 = vadd.f32 0.0, %v450
      %452 = vmatmul.f32.gmra.mxu0 %v195
      %v453 = vpop.f32.mrf.mxu0
      %v454 = vadd.f32 0.0, %v453
      %455 = vmatmul.f32.gmra.mxu0 %v199
      %v456 = vpop.f32.mrf.mxu0
      %v457 = vadd.f32 0.0, %v456
      %458 = vmatmul.f32.gmra.mxu0 %v203
      %v459 = vpop.f32.mrf.mxu0
      %v460 = vadd.f32 0.0, %v459
      %461 = vmatmul.f32.gmra.mxu0 %v207
      %v462 = vpop.f32.mrf.mxu0
      %v463 = vadd.f32 0.0, %v462
      %464 = vmatmul.f32.gmra.mxu0 %v211
      %v465 = vpop.f32.mrf.mxu0
      %v466 = vadd.f32 0.0, %v465
      %467 = vmatmul.f32.gmra.mxu0 %v215
      %v468 = vpop.f32.mrf.mxu0
      %v469 = vadd.f32 0.0, %v468
      %470 = vmatmul.f32.gmra.mxu0 %v219
      %v471 = vpop.f32.mrf.mxu0
      %v472 = vadd.f32 0.0, %v471
      %473 = vmatmul.f32.gmra.mxu0 %v223
      %v474 = vpop.f32.mrf.mxu0
      %v475 = vadd.f32 0.0, %v474
      %476 = vmatmul.f32.gmra.mxu0 %v227
      %v477 = vpop.f32.mrf.mxu0
      %v478 = vadd.f32 0.0, %v477
      %479 = vmatmul.f32.gmra.mxu0 %v231
      %v480 = vpop.f32.mrf.mxu0
      %v481 = vadd.f32 0.0, %v480
      %482 = vmatmul.f32.gmra.mxu0 %v235
      %v483 = vpop.f32.mrf.mxu0
      %v484 = vadd.f32 0.0, %v483
      %485 = vmatmul.f32.gmra.mxu0 %v239
      %v486 = vpop.f32.mrf.mxu0
      %v487 = vadd.f32 0.0, %v486
      %488 = vmatmul.f32.gmra.mxu0 %v243
      %v489 = vpop.f32.mrf.mxu0
      %v490 = vadd.f32 0.0, %v489
      %491 = vmatmul.f32.gmra.mxu0 %v247
      %v492 = vpop.f32.mrf.mxu0
      %v493 = vadd.f32 0.0, %v492
      %494 = vmatmul.f32.gmra.mxu0 %v251
      %v495 = vpop.f32.mrf.mxu0
      %v496 = vadd.f32 0.0, %v495
      %497 = vmatmul.f32.gmra.mxu0 %v255
      %v498 = vpop.f32.mrf.mxu0
      %v499 = vadd.f32 0.0, %v498
      %500 = vmatmul.f32.gmra.mxu0 %v259
      %v501 = vpop.f32.mrf.mxu0
      %v502 = vadd.f32 0.0, %v501
      %503 = vmatmul.f32.gmra.mxu0 %v263
      %v504 = vpop.f32.mrf.mxu0
      %v505 = vadd.f32 0.0, %v504
      %506 = vmatmul.f32.gmra.mxu0 %v267
      %v507 = vpop.f32.mrf.mxu0
      %v508 = vadd.f32 0.0, %v507
      %509 = vmatmul.f32.gmra.mxu0 %v271
      %v510 = vpop.f32.mrf.mxu0
      %v511 = vadd.f32 0.0, %v510
      %512 = vmatmul.f32.gmra.mxu0 %v275
      %v513 = vpop.f32.mrf.mxu0
      %v514 = vadd.f32 0.0, %v513
      %515 = vmatmul.f32.gmra.mxu0 %v279
      %v516 = vpop.f32.mrf.mxu0
      %v517 = vadd.f32 0.0, %v516
      %518 = vdwg.mxu0
      %519 = vmatpush.msra.mxu0 %v314
      %520 = vmatpush.msra.mxu0 %v313
      %521 = vmatpush.msra.mxu0 %v312
      %522 = vmatpush.msra.mxu0 %v311
      %523 = vmatpush.msra.mxu0 %v310
      %524 = vmatpush.msra.mxu0 %v309
      %525 = vmatpush.msra.mxu0 %v308
      %526 = vmatpush.msra.mxu0 %v307
      %527 = vmatpush.msra.mxu0 %v306
      %528 = vmatpush.msra.mxu0 %v305
      %529 = vmatpush.msra.mxu0 %v304
      %530 = vmatpush.msra.mxu0 %v303
      %531 = vmatpush.msra.mxu0 %v302
      %532 = vmatpush.msra.mxu0 %v301
      %533 = vmatpush.msra.mxu0 %v300
      %534 = vmatpush.msra.mxu0 %v299
      %535 = vmatmul.f32.gmra.mxu0 %v172
      %v536 = vpop.f32.mrf.mxu0
      %v537 = vadd.f32 %v436, %v536
      %538 = vmatmul.f32.gmra.mxu0 %v176
      %v539 = vpop.f32.mrf.mxu0
      %v540 = vadd.f32 %v439, %v539
      %541 = vmatmul.f32.gmra.mxu0 %v180
      %v542 = vpop.f32.mrf.mxu0
      %v543 = vadd.f32 %v442, %v542
      %544 = vmatmul.f32.gmra.mxu0 %v184
      %v545 = vpop.f32.mrf.mxu0
      %v546 = vadd.f32 %v445, %v545
      %547 = vmatmul.f32.gmra.mxu0 %v188
      %v548 = vpop.f32.mrf.mxu0
      %v549 = vadd.f32 %v448, %v548
      %550 = vmatmul.f32.gmra.mxu0 %v192
      %v551 = vpop.f32.mrf.mxu0
      %v552 = vadd.f32 %v451, %v551
      %553 = vmatmul.f32.gmra.mxu0 %v196
      %v554 = vpop.f32.mrf.mxu0
      %v555 = vadd.f32 %v454, %v554
      %556 = vmatmul.f32.gmra.mxu0 %v200
      %v557 = vpop.f32.mrf.mxu0
      %v558 = vadd.f32 %v457, %v557
      %559 = vmatmul.f32.gmra.mxu0 %v204
      %v560 = vpop.f32.mrf.mxu0
      %v561 = vadd.f32 %v460, %v560
      %562 = vmatmul.f32.gmra.mxu0 %v208
      %v563 = vpop.f32.mrf.mxu0
      %v564 = vadd.f32 %v463, %v563
      %565 = vmatmul.f32.gmra.mxu0 %v212
      %v566 = vpop.f32.mrf.mxu0
      %v567 = vadd.f32 %v466, %v566
      %568 = vmatmul.f32.gmra.mxu0 %v216
      %v569 = vpop.f32.mrf.mxu0
      %v570 = vadd.f32 %v469, %v569
      %571 = vmatmul.f32.gmra.mxu0 %v220
      %v572 = vpop.f32.mrf.mxu0
      %v573 = vadd.f32 %v472, %v572
      %574 = vmatmul.f32.gmra.mxu0 %v224
      %v575 = vpop.f32.mrf.mxu0
      %v576 = vadd.f32 %v475, %v575
      %577 = vmatmul.f32.gmra.mxu0 %v228
      %v578 = vpop.f32.mrf.mxu0
      %v579 = vadd.f32 %v478, %v578
      %580 = vmatmul.f32.gmra.mxu0 %v232
      %v581 = vpop.f32.mrf.mxu0
      %v582 = vadd.f32 %v481, %v581
      %583 = vmatmul.f32.gmra.mxu0 %v236
      %v584 = vpop.f32.mrf.mxu0
      %v585 = vadd.f32 %v484, %v584
      %586 = vmatmul.f32.gmra.mxu0 %v240
      %v587 = vpop.f32.mrf.mxu0
      %v588 = vadd.f32 %v487, %v587
      %589 = vmatmul.f32.gmra.mxu0 %v244
      %v590 = vpop.f32.mrf.mxu0
      %v591 = vadd.f32 %v490, %v590
      %592 = vmatmul.f32.gmra.mxu0 %v248
      %v593 = vpop.f32.mrf.mxu0
      %v594 = vadd.f32 %v493, %v593
      %595 = vmatmul.f32.gmra.mxu0 %v252
      %v596 = vpop.f32.mrf.mxu0
      %v597 = vadd.f32 %v496, %v596
      %598 = vmatmul.f32.gmra.mxu0 %v256
      %v599 = vpop.f32.mrf.mxu0
      %v600 = vadd.f32 %v499, %v599
      %601 = vmatmul.f32.gmra.mxu0 %v260
      %v602 = vpop.f32.mrf.mxu0
      %v603 = vadd.f32 %v502, %v602
      %604 = vmatmul.f32.gmra.mxu0 %v264
      %v605 = vpop.f32.mrf.mxu0
      %v606 = vadd.f32 %v505, %v605
      %607 = vmatmul.f32.gmra.mxu0 %v268
      %v608 = vpop.f32.mrf.mxu0
      %v609 = vadd.f32 %v508, %v608
      %610 = vmatmul.f32.gmra.mxu0 %v272
      %v611 = vpop.f32.mrf.mxu0
      %v612 = vadd.f32 %v511, %v611
      %613 = vmatmul.f32.gmra.mxu0 %v276
      %v614 = vpop.f32.mrf.mxu0
      %v615 = vadd.f32 %v514, %v614
      %616 = vmatmul.f32.gmra.mxu0 %v280
      %v617 = vpop.f32.mrf.mxu0
      %v618 = vadd.f32 %v517, %v617
      %619 = vdwg.mxu0
      %620 = vmatpush.msra.mxu0 %v330
      %621 = vmatpush.msra.mxu0 %v329
      %622 = vmatpush.msra.mxu0 %v328
      %623 = vmatpush.msra.mxu0 %v327
      %624 = vmatpush.msra.mxu0 %v326
      %625 = vmatpush.msra.mxu0 %v325
      %626 = vmatpush.msra.mxu0 %v324
      %627 = vmatpush.msra.mxu0 %v323
      %628 = vmatpush.msra.mxu0 %v322
      %629 = vmatpush.msra.mxu0 %v321
      %630 = vmatpush.msra.mxu0 %v320
      %631 = vmatpush.msra.mxu0 %v319
      %632 = vmatpush.msra.mxu0 %v318
      %633 = vmatpush.msra.mxu0 %v317
      %634 = vmatpush.msra.mxu0 %v316
      %635 = vmatpush.msra.mxu0 %v315
      %636 = vmatmul.f32.gmra.mxu0 %v173
      %v637 = vpop.f32.mrf.mxu0
      %v638 = vadd.f32 %v537, %v637
      %639 = vmatmul.f32.gmra.mxu0 %v177
      %v640 = vpop.f32.mrf.mxu0
      %v641 = vadd.f32 %v540, %v640
      %642 = vmatmul.f32.gmra.mxu0 %v181
      %v643 = vpop.f32.mrf.mxu0
      %v644 = vadd.f32 %v543, %v643
      %645 = vmatmul.f32.gmra.mxu0 %v185
      %v646 = vpop.f32.mrf.mxu0
      %v647 = vadd.f32 %v546, %v646
      %648 = vmatmul.f32.gmra.mxu0 %v189
      %v649 = vpop.f32.mrf.mxu0
      %v650 = vadd.f32 %v549, %v649
      %651 = vmatmul.f32.gmra.mxu0 %v193
      %v652 = vpop.f32.mrf.mxu0
      %v653 = vadd.f32 %v552, %v652
      %654 = vmatmul.f32.gmra.mxu0 %v197
      %v655 = vpop.f32.mrf.mxu0
      %v656 = vadd.f32 %v555, %v655
      %657 = vmatmul.f32.gmra.mxu0 %v201
      %v658 = vpop.f32.mrf.mxu0
      %v659 = vadd.f32 %v558, %v658
      %660 = vmatmul.f32.gmra.mxu0 %v205
      %v661 = vpop.f32.mrf.mxu0
      %v662 = vadd.f32 %v561, %v661
      %663 = vmatmul.f32.gmra.mxu0 %v209
      %v664 = vpop.f32.mrf.mxu0
      %v665 = vadd.f32 %v564, %v664
      %666 = vmatmul.f32.gmra.mxu0 %v213
      %v667 = vpop.f32.mrf.mxu0
      %v668 = vadd.f32 %v567, %v667
      %669 = vmatmul.f32.gmra.mxu0 %v217
      %v670 = vpop.f32.mrf.mxu0
      %v671 = vadd.f32 %v570, %v670
      %672 = vmatmul.f32.gmra.mxu0 %v221
      %v673 = vpop.f32.mrf.mxu0
      %v674 = vadd.f32 %v573, %v673
      %675 = vmatmul.f32.gmra.mxu0 %v225
      %v676 = vpop.f32.mrf.mxu0
      %v677 = vadd.f32 %v576, %v676
      %678 = vmatmul.f32.gmra.mxu0 %v229
      %v679 = vpop.f32.mrf.mxu0
      %v680 = vadd.f32 %v579, %v679
      %681 = vmatmul.f32.gmra.mxu0 %v233
      %v682 = vpop.f32.mrf.mxu0
      %v683 = vadd.f32 %v582, %v682
      %684 = vmatmul.f32.gmra.mxu0 %v237
      %v685 = vpop.f32.mrf.mxu0
      %v686 = vadd.f32 %v585, %v685
      %687 = vmatmul.f32.gmra.mxu0 %v241
      %v688 = vpop.f32.mrf.mxu0
      %v689 = vadd.f32 %v588, %v688
      %690 = vmatmul.f32.gmra.mxu0 %v245
      %v691 = vpop.f32.mrf.mxu0
      %v692 = vadd.f32 %v591, %v691
      %693 = vmatmul.f32.gmra.mxu0 %v249
      %v694 = vpop.f32.mrf.mxu0
      %v695 = vadd.f32 %v594, %v694
      %696 = vmatmul.f32.gmra.mxu0 %v253
      %v697 = vpop.f32.mrf.mxu0
      %v698 = vadd.f32 %v597, %v697
      %699 = vmatmul.f32.gmra.mxu0 %v257
      %v700 = vpop.f32.mrf.mxu0
      %v701 = vadd.f32 %v600, %v700
      %702 = vmatmul.f32.gmra.mxu0 %v261
      %v703 = vpop.f32.mrf.mxu0
      %v704 = vadd.f32 %v603, %v703
      %705 = vmatmul.f32.gmra.mxu0 %v265
      %v706 = vpop.f32.mrf.mxu0
      %v707 = vadd.f32 %v606, %v706
      %708 = vmatmul.f32.gmra.mxu0 %v269
      %v709 = vpop.f32.mrf.mxu0
      %v710 = vadd.f32 %v609, %v709
      %711 = vmatmul.f32.gmra.mxu0 %v273
      %v712 = vpop.f32.mrf.mxu0
      %v713 = vadd.f32 %v612, %v712
      %714 = vmatmul.f32.gmra.mxu0 %v277
      %v715 = vpop.f32.mrf.mxu0
      %v716 = vadd.f32 %v615, %v715
      %717 = vmatmul.f32.gmra.mxu0 %v281
      %v718 = vpop.f32.mrf.mxu0
      %v719 = vadd.f32 %v618, %v718
      %720 = vdwg.mxu0
      %721 = vmatpush.msra.mxu0 0.0
      %722 = vmatpush.msra.mxu0 0.0
      %723 = vmatpush.msra.mxu0 0.0
      %724 = vmatpush.msra.mxu0 0.0
      %725 = vmatpush.msra.mxu0 0.0
      %726 = vmatpush.msra.mxu0 0.0
      %727 = vmatpush.msra.mxu0 0.0
      %728 = vmatpush.msra.mxu0 0.0
      %729 = vmatpush.msra.mxu0 0.0
      %730 = vmatpush.msra.mxu0 0.0
      %731 = vmatpush.msra.mxu0 0.0
      %732 = vmatpush.msra.mxu0 0.0
      %733 = vmatpush.msra.mxu0 0.0
      %734 = vmatpush.msra.mxu0 0.0
      %735 = vmatpush.msra.mxu0 %v332
      %736 = vmatpush.msra.mxu0 %v331
      %737 = vmatmul.f32.gmra.mxu0 %v335
      %v738 = vpop.f32.mrf.mxu0
      %v739 = vadd.f32 %v638, %v738
      %740 = vmatmul.f32.gmra.mxu0 %v338
      %v741 = vpop.f32.mrf.mxu0
      %v742 = vadd.f32 %v641, %v741
      %743 = vmatmul.f32.gmra.mxu0 %v341
      %v744 = vpop.f32.mrf.mxu0
      %v745 = vadd.f32 %v644, %v744
      %746 = vmatmul.f32.gmra.mxu0 %v344
      %v747 = vpop.f32.mrf.mxu0
      %v748 = vadd.f32 %v647, %v747
      %749 = vmatmul.f32.gmra.mxu0 %v347
      %v750 = vpop.f32.mrf.mxu0
      %v751 = vadd.f32 %v650, %v750
      %752 = vmatmul.f32.gmra.mxu0 %v350
      %v753 = vpop.f32.mrf.mxu0
      %v754 = vadd.f32 %v653, %v753
      %755 = vmatmul.f32.gmra.mxu0 %v353
      %v756 = vpop.f32.mrf.mxu0
      %v757 = vadd.f32 %v656, %v756
      %758 = vmatmul.f32.gmra.mxu0 %v356
      %v759 = vpop.f32.mrf.mxu0
      %v760 = vadd.f32 %v659, %v759
      %761 = vmatmul.f32.gmra.mxu0 %v359
      %v762 = vpop.f32.mrf.mxu0
      %v763 = vadd.f32 %v662, %v762
      %764 = vmatmul.f32.gmra.mxu0 %v362
      %v765 = vpop.f32.mrf.mxu0
      %v766 = vadd.f32 %v665, %v765
      %767 = vmatmul.f32.gmra.mxu0 %v365
      %v768 = vpop.f32.mrf.mxu0
      %v769 = vadd.f32 %v668, %v768
      %770 = vmatmul.f32.gmra.mxu0 %v368
      %v771 = vpop.f32.mrf.mxu0
      %v772 = vadd.f32 %v671, %v771
      %773 = vmatmul.f32.gmra.mxu0 %v371
      %v774 = vpop.f32.mrf.mxu0
      %v775 = vadd.f32 %v674, %v774
      %776 = vmatmul.f32.gmra.mxu0 %v374
      %v777 = vpop.f32.mrf.mxu0
      %v778 = vadd.f32 %v677, %v777
      %779 = vmatmul.f32.gmra.mxu0 %v377
      %v780 = vpop.f32.mrf.mxu0
      %v781 = vadd.f32 %v680, %v780
      %782 = vmatmul.f32.gmra.mxu0 %v380
      %v783 = vpop.f32.mrf.mxu0
      %v784 = vadd.f32 %v683, %v783
      %785 = vmatmul.f32.gmra.mxu0 %v383
      %v786 = vpop.f32.mrf.mxu0
      %v787 = vadd.f32 %v686, %v786
      %788 = vmatmul.f32.gmra.mxu0 %v386
      %v789 = vpop.f32.mrf.mxu0
      %v790 = vadd.f32 %v689, %v789
      %791 = vmatmul.f32.gmra.mxu0 %v389
      %v792 = vpop.f32.mrf.mxu0
      %v793 = vadd.f32 %v692, %v792
      %794 = vmatmul.f32.gmra.mxu0 %v392
      %v795 = vpop.f32.mrf.mxu0
      %v796 = vadd.f32 %v695, %v795
      %797 = vmatmul.f32.gmra.mxu0 %v395
      %v798 = vpop.f32.mrf.mxu0
      %v799 = vadd.f32 %v698, %v798
      %800 = vmatmul.f32.gmra.mxu0 %v398
      %v801 = vpop.f32.mrf.mxu0
      %v802 = vadd.f32 %v701, %v801
      %803 = vmatmul.f32.gmra.mxu0 %v401
      %v804 = vpop.f32.mrf.mxu0
      %v805 = vadd.f32 %v704, %v804
      %806 = vmatmul.f32.gmra.mxu0 %v404
      %v807 = vpop.f32.mrf.mxu0
      %v808 = vadd.f32 %v707, %v807
      %809 = vmatmul.f32.gmra.mxu0 %v407
      %v810 = vpop.f32.mrf.mxu0
      %v811 = vadd.f32 %v710, %v810
      %812 = vmatmul.f32.gmra.mxu0 %v410
      %v813 = vpop.f32.mrf.mxu0
      %v814 = vadd.f32 %v713, %v813
      %815 = vmatmul.f32.gmra.mxu0 %v413
      %v816 = vpop.f32.mrf.mxu0
      %v817 = vadd.f32 %v716, %v816
      %818 = vmatmul.f32.gmra.mxu0 %v416
      %v819 = vpop.f32.mrf.mxu0
      %v820 = vadd.f32 %v719, %v819
      %821 = vdwg.mxu0
      %vm822 = vcmask 261120
      %v823 = vsel %vm822, %v739, -inf
      %v824 = vsel %vm822, %v760, -inf
      %v825 = vmax.f32 %v823, %v824
      %v826 = vsel %vm822, %v781, -inf
      %v827 = vmax.f32 %v825, %v826
      %v828 = vsel %vm822, %v802, -inf
      %v829 = vmax.f32 %v827, %v828
      %v830 = vsel %vm822, %v742, -inf
      %v831 = vsel %vm822, %v763, -inf
      %v832 = vmax.f32 %v830, %v831
      %v833 = vsel %vm822, %v784, -inf
      %v834 = vmax.f32 %v832, %v833
      %v835 = vsel %vm822, %v805, -inf
      %v836 = vmax.f32 %v834, %v835
      %v837 = vsel %vm822, %v745, -inf
      %v838 = vsel %vm822, %v766, -inf
      %v839 = vmax.f32 %v837, %v838
      %v840 = vsel %vm822, %v787, -inf
      %v841 = vmax.f32 %v839, %v840
      %v842 = vsel %vm822, %v808, -inf
      %v843 = vmax.f32 %v841, %v842
      %v844 = vsel %vm822, %v748, -inf
      %v845 = vsel %vm822, %v769, -inf
      %v846 = vmax.f32 %v844, %v845
      %v847 = vsel %vm822, %v790, -inf
      %v848 = vmax.f32 %v846, %v847
      %v849 = vsel %vm822, %v811, -inf
      %v850 = vmax.f32 %v848, %v849
      %v851 = vsel %vm822, %v751, -inf
      %v852 = vsel %vm822, %v772, -inf
      %v853 = vmax.f32 %v851, %v852
      %v854 = vsel %vm822, %v793, -inf
      %v855 = vmax.f32 %v853, %v854
      %v856 = vsel %vm822, %v814, -inf
      %v857 = vmax.f32 %v855, %v856
      %v858 = vsel %vm822, %v754, -inf
      %v859 = vsel %vm822, %v775, -inf
      %v860 = vmax.f32 %v858, %v859
      %v861 = vsel %vm822, %v796, -inf
      %v862 = vmax.f32 %v860, %v861
      %v863 = vsel %vm822, %v817, -inf
      %v864 = vmax.f32 %v862, %v863
      %v865 = vsel %vm822, %v757, -inf
      %v866 = vsel %vm822, %v778, -inf
      %v867 = vmax.f32 %v865, %v866
      %v868 = vsel %vm822, %v799, -inf
      %v869 = vmax.f32 %v867, %v868
      %v870 = vsel %vm822, %v820, -inf
      %v871 = vmax.f32 %v869, %v870
      %v872 = vld [vmem:[%s2] sm:$0x1]
      %v874 = vperm.slane %v872, 0
      %v876 = vadd.f32 %v829, %v874
      %v877 = vadd.f32 %v836, %v874
      %v878 = vadd.f32 %v843, %v874
      %v879 = vadd.f32 %v850, %v874
      %v880 = vadd.f32 %v857, %v874
      %v881 = vadd.f32 %v864, %v874
      %v882 = vadd.f32 %v871, %v874
      %v883 = vmax.f32 %v876, 0.0
      %v884 = vmax.f32 %v877, 0.0
      %v885 = vmax.f32 %v878, 0.0
      %v886 = vmax.f32 %v879, 0.0
      %v887 = vmax.f32 %v880, 0.0
      %v888 = vmax.f32 %v881, 0.0
      %v889 = vmax.f32 %v882, 0.0
      %890 = vst.msk [vmem:[%s170] sm:$0xff] %vm822, %v883
      %891 = vst.msk [vmem:[%s170 + $0x8] sm:$0xff] %vm822, %v884
      %892 = vst.msk [vmem:[%s170 + $0x10] sm:$0xff] %vm822, %v885
      %893 = vst.msk [vmem:[%s170 + $0x18] sm:$0xff] %vm822, %v886
      %894 = vst.msk [vmem:[%s170 + $0x20] sm:$0xff] %vm822, %v887
      %895 = vst.msk [vmem:[%s170 + $0x28] sm:$0xff] %vm822, %v888
      %896 = vst.msk [vmem:[%s170 + $0x30] sm:$0xff] %vm822, %v889
      %p897 = scmp.lt.s32.totalorder %s14, 1
      %s898 = scalar_select %p897, %s14, 1
      %s899 = smul.addr %s898, 7
      %s900 = smul.addr %s899, 8
      %s901 = scalar_lea.vmem %s3, %s900
      // Predicated region
      $region33: #{cnn_forward.4} parent=31 // pred_check
        %p902 = pneg %p100
      $region34: #{cnn_forward.4} parent=31 // pred_check_branch
        %904 = sbr.rel (%p902) target = $region36
      $region35: #{cnn_forward.4} parent=31 // pred_region
        _
      $region36: #{cnn_forward.4} parent=31 // pred_fallthru
        _
    $region32: #{cnn_forward.4} parent=5 // pred_fallthru
      _
    %p905 = scmp.le.s32.totalorder 2, %s9
    // Predicated region
    $region37: #{cnn_forward.4} parent=5 // pred_check
      %p906 = pneg %p905
    $region38: #{cnn_forward.4} parent=5 // pred_check_branch
      %908 = sbr.rel (%p906) target = $region40
    $region39: #{cnn_forward.4} parent=5 // pred_region
      %s909 = ssub.s32 %s9, 2
      // Predicated region
      $region41: #{cnn_forward.4} parent=39 // pred_check
        %p910 = pneg %p106
      $region42: #{cnn_forward.4} parent=39 // pred_check_branch
        %912 = sbr.rel (%p910) target = $region44
      $region43: #{cnn_forward.4} parent=39 // pred_region
        %p913 = scmp.lt.s32.totalorder %s15, 1
        %s914 = scalar_select %p913, %s15, 1
        %s915 = smul.addr %s914, 7
        %s916 = smul.addr %s915, 8
        %s917 = scalar_lea.vmem %s3, %s916
      $region44: #{cnn_forward.4} parent=39 // pred_fallthru
        _
    $region40: #{cnn_forward.4} parent=5 // pred_fallthru
      _
  $region6: #{cnn_forward.4} parent=0 // loop_footer
    %s13 = sadd.s32 1, %s9
  $region7: #{cnn_forward.4} parent=0 // loop_footer_branch
    %8 = sbr.rel target = $region3
  $region8: #{cnn_forward.4} parent=0 // loop_exit
    _

// kernel: cnn_forward.5
$region0: #{cnn_forward.5}
  #allocation0 [shape = 'u32[]', space=smem, size = 0x4, offset = 0x4, fixed_abs, tag = 'smem constant byte address 0x4 - core index']
  #allocation1 [shape = 'u32[72,128]{1,0:T(1,128)}', space=vmem, size = 0x9000, scoped, tag = 'internal scratch']
  %s0 = inlined_call_operand.vmem [shape: f32[2,1568], index: 0, kind: input, shape index: {}]
  %s1 = inlined_call_operand.vmem [shape: f32[1568,10], index: 1, kind: input, shape index: {}]
  %s2 = inlined_call_operand.vmem [shape: f32[1,10], index: 2, kind: input, shape index: {}]
  %s3 = inlined_call_operand.hbm [shape: f32[2,10], index: 3, kind: output, shape index: {}]
  %s4 = sld [smem:[#allocation0]]
  $region22: #{cnn_forward.5} parent=0
    _
  %s6 = ssub.s32 1, %s4
  %s7 = scalar_select 0, %s6, %s4
  $region1: #{cnn_forward.5} parent=0
    #allocation2 [shape = 'u8[1024]{0}', space=vmem, size = 0x400, scoped, tag = 'output window, operand 0, single buffered']
    #allocation3 [shape = 's32[1]{0}', space=sflag, size = 0x4, scoped, tag = 'scoped memory for cnn_forward.5']
    %8 = vsyncpa [#allocation3], 0
    // Predicated region
    $region2: #{cnn_forward.5} parent=1 // pred_check
      _
    $region3: #{cnn_forward.5} parent=1 // pred_check_branch
      %10 = sbr.rel (0) target = $region5
    $region4: #{cnn_forward.5} parent=1 // pred_region
      _
    $region5: #{cnn_forward.5} parent=1 // pred_fallthru
      _
    // Predicated region
    $region6: #{cnn_forward.5} parent=1 // pred_check
      _
    $region7: #{cnn_forward.5} parent=1 // pred_check_branch
      %12 = sbr.rel (0) target = $region9
    $region8: #{cnn_forward.5} parent=1 // pred_region
      _
    $region9: #{cnn_forward.5} parent=1 // pred_fallthru
      _
    // Predicated region
    $region10: #{cnn_forward.5} parent=1 // pred_check
      _
    $region11: #{cnn_forward.5} parent=1 // pred_check_branch
      %14 = sbr.rel (0) target = $region13
    $region12: #{cnn_forward.5} parent=1 // pred_region
      _
    $region13: #{cnn_forward.5} parent=1 // pred_fallthru
      _
    %v15 = vld [vmem:[%s0] sm:$0xff]
    %v16 = vld [vmem:[%s0 + $0x8] sm:$0xff]
    %v17 = vld [vmem:[%s0 + $0x10] sm:$0xff]
    %v18 = vld [vmem:[%s0 + $0x18] sm:$0x3]
    %v19 = vld [vmem:[%s1] sm:$0xff]
    %v20 = vld [vmem:[%s1 + $0x8] sm:$0xff]
    %v21 = vld [vmem:[%s1 + $0x10] sm:$0xff]
    %v22 = vld [vmem:[%s1 + $0x18] sm:$0xff]
    %v23 = vld [vmem:[%s1 + $0x20] sm:$0xff]
    %v24 = vld [vmem:[%s1 + $0x28] sm:$0xff]
    %v25 = vld [vmem:[%s1 + $0x30] sm:$0xff]
    %v26 = vld [vmem:[%s1 + $0x38] sm:$0xff]
    %v27 = vld [vmem:[%s1 + $0x40] sm:$0xff]
    %v28 = vld [vmem:[%s1 + $0x48] sm:$0xff]
    %v29 = vld [vmem:[%s1 + $0x50] sm:$0xff]
    %v30 = vld [vmem:[%s1 + $0x58] sm:$0xff]
    %v31 = vld [vmem:[%s1 + $0x60] sm:$0xff]
    %v32 = vld [vmem:[%s1 + $0x68] sm:$0xff]
    %v33 = vld [vmem:[%s1 + $0x70] sm:$0xff]
    %v34 = vld [vmem:[%s1 + $0x78] sm:$0xff]
    %v35 = vld [vmem:[%s1 + $0x80] sm:$0xff]
    %v36 = vld [vmem:[%s1 + $0x88] sm:$0xff]
    %v37 = vld [vmem:[%s1 + $0x90] sm:$0xff]
    %v38 = vld [vmem:[%s1 + $0x98] sm:$0xff]
    %v39 = vld [vmem:[%s1 + $0xa0] sm:$0xff]
    %v40 = vld [vmem:[%s1 + $0xa8] sm:$0xff]
    %v41 = vld [vmem:[%s1 + $0xb0] sm:$0xff]
    %v42 = vld [vmem:[%s1 + $0xb8] sm:$0xff]
    %v43 = vld [vmem:[%s1 + $0xc0] sm:$0xff]
    %v44 = vld [vmem:[%s1 + $0xc8] sm:$0xff]
    %v45 = vld [vmem:[%s1 + $0xd0] sm:$0xff]
    %v46 = vld [vmem:[%s1 + $0xd8] sm:$0xff]
    %v47 = vld [vmem:[%s1 + $0xe0] sm:$0xff]
    %v48 = vld [vmem:[%s1 + $0xe8] sm:$0xff]
    %v49 = vld [vmem:[%s1 + $0xf0] sm:$0xff]
    %v50 = vld [vmem:[%s1 + $0xf8] sm:$0xff]
    %v51 = vld [vmem:[%s1 + $0x100] sm:$0xff]
    %v52 = vld [vmem:[%s1 + $0x108] sm:$0xff]
    %v53 = vld [vmem:[%s1 + $0x110] sm:$0xff]
    %v54 = vld [vmem:[%s1 + $0x118] sm:$0xff]
    %v55 = vld [vmem:[%s1 + $0x120] sm:$0xff]
    %v56 = vld [vmem:[%s1 + $0x128] sm:$0xff]
    %v57 = vld [vmem:[%s1 + $0x130] sm:$0xff]
    %v58 = vld [vmem:[%s1 + $0x138] sm:$0xff]
    %v59 = vld [vmem:[%s1 + $0x140] sm:$0xff]
    %v60 = vld [vmem:[%s1 + $0x148] sm:$0xff]
    %v61 = vld [vmem:[%s1 + $0x150] sm:$0xff]
    %v62 = vld [vmem:[%s1 + $0x158] sm:$0xff]
    %v63 = vld [vmem:[%s1 + $0x160] sm:$0xff]
    %v64 = vld [vmem:[%s1 + $0x168] sm:$0xff]
    %v65 = vld [vmem:[%s1 + $0x170] sm:$0xff]
    %v66 = vld [vmem:[%s1 + $0x178] sm:$0xff]
    %v67 = vld [vmem:[%s1 + $0x180] sm:$0xff]
    %v68 = vld [vmem:[%s1 + $0x188] sm:$0xff]
    %v69 = vld [vmem:[%s1 + $0x190] sm:$0xff]
    %v70 = vld [vmem:[%s1 + $0x198] sm:$0xff]
    %v71 = vld [vmem:[%s1 + $0x1a0] sm:$0xff]
    %v72 = vld [vmem:[%s1 + $0x1a8] sm:$0xff]
    %v73 = vld [vmem:[%s1 + $0x1b0] sm:$0xff]
    %v74 = vld [vmem:[%s1 + $0x1b8] sm:$0xff]
    %v75 = vld [vmem:[%s1 + $0x1c0] sm:$0xff]
    %v76 = vld [vmem:[%s1 + $0x1c8] sm:$0xff]
    %v77 = vld [vmem:[%s1 + $0x1d0] sm:$0xff]
    %v78 = vld [vmem:[%s1 + $0x1d8] sm:$0xff]
    %v79 = vld [vmem:[%s1 + $0x1e0] sm:$0xff]
    %v80 = vld [vmem:[%s1 + $0x1e8] sm:$0xff]
    %v81 = vld [vmem:[%s1 + $0x1f0] sm:$0xff]
    %v82 = vld [vmem:[%s1 + $0x1f8] sm:$0xff]
    %v83 = vld [vmem:[%s1 + $0x200] sm:$0xff]
    %v84 = vld [vmem:[%s1 + $0x208] sm:$0xff]
    %v85 = vld [vmem:[%s1 + $0x210] sm:$0xff]
    %v86 = vld [vmem:[%s1 + $0x218] sm:$0xff]
    %v87 = vld [vmem:[%s1 + $0x220] sm:$0xff]
    %v88 = vld [vmem:[%s1 + $0x228] sm:$0xff]
    %v89 = vld [vmem:[%s1 + $0x230] sm:$0xff]
    %v90 = vld [vmem:[%s1 + $0x238] sm:$0xff]
    %v91 = vld [vmem:[%s1 + $0x240] sm:$0xff]
    %v92 = vld [vmem:[%s1 + $0x248] sm:$0xff]
    %v93 = vld [vmem:[%s1 + $0x250] sm:$0xff]
    %v94 = vld [vmem:[%s1 + $0x258] sm:$0xff]
    %v95 = vld [vmem:[%s1 + $0x260] sm:$0xff]
    %v96 = vld [vmem:[%s1 + $0x268] sm:$0xff]
    %v97 = vld [vmem:[%s1 + $0x270] sm:$0xff]
    %v98 = vld [vmem:[%s1 + $0x278] sm:$0xff]
    %v99 = vld [vmem:[%s1 + $0x280] sm:$0xff]
    %v100 = vld [vmem:[%s1 + $0x288] sm:$0xff]
    %v101 = vld [vmem:[%s1 + $0x290] sm:$0xff]
    %v102 = vld [vmem:[%s1 + $0x298] sm:$0xff]
    %v103 = vld [vmem:[%s1 + $0x2a0] sm:$0xff]
    %v104 = vld [vmem:[%s1 + $0x2a8] sm:$0xff]
    %v105 = vld [vmem:[%s1 + $0x2b0] sm:$0xff]
    %v106 = vld [vmem:[%s1 + $0x2b8] sm:$0xff]
    %v107 = vld [vmem:[%s1 + $0x2c0] sm:$0xff]
    %v108 = vld [vmem:[%s1 + $0x2c8] sm:$0xff]
    %v109 = vld [vmem:[%s1 + $0x2d0] sm:$0xff]
    %v110 = vld [vmem:[%s1 + $0x2d8] sm:$0xff]
    %v111 = vld [vmem:[%s1 + $0x2e0] sm:$0xff]
    %v112 = vld [vmem:[%s1 + $0x2e8] sm:$0xff]
    %v113 = vld [vmem:[%s1 + $0x2f0] sm:$0xff]
    %v114 = vld [vmem:[%s1 + $0x2f8] sm:$0xff]
    %v115 = vld [vmem:[%s1 + $0x300] sm:$0xff]
    %v116 = vld [vmem:[%s1 + $0x308] sm:$0xff]
    %v117 = vld [vmem:[%s1 + $0x310] sm:$0xff]
    %v118 = vld [vmem:[%s1 + $0x318] sm:$0xff]
    %v119 = vld [vmem:[%s1 + $0x320] sm:$0xff]
    %v120 = vld [vmem:[%s1 + $0x328] sm:$0xff]
    %v121 = vld [vmem:[%s1 + $0x330] sm:$0xff]
    %v122 = vld [vmem:[%s1 + $0x338] sm:$0xff]
    %v123 = vld [vmem:[%s1 + $0x340] sm:$0xff]
    %v124 = vld [vmem:[%s1 + $0x348] sm:$0xff]
    %v125 = vld [vmem:[%s1 + $0x350] sm:$0xff]
    %v126 = vld [vmem:[%s1 + $0x358] sm:$0xff]
    %v127 = vld [vmem:[%s1 + $0x360] sm:$0xff]
    %v128 = vld [vmem:[%s1 + $0x368] sm:$0xff]
    %v129 = vld [vmem:[%s1 + $0x370] sm:$0xff]
    %v130 = vld [vmem:[%s1 + $0x378] sm:$0xff]
    %v131 = vld [vmem:[%s1 + $0x380] sm:$0xff]
    %v132 = vld [vmem:[%s1 + $0x388] sm:$0xff]
    %v133 = vld [vmem:[%s1 + $0x390] sm:$0xff]
    %v134 = vld [vmem:[%s1 + $0x398] sm:$0xff]
    %v135 = vld [vmem:[%s1 + $0x3a0] sm:$0xff]
    %v136 = vld [vmem:[%s1 + $0x3a8] sm:$0xff]
    %v137 = vld [vmem:[%s1 + $0x3b0] sm:$0xff]
    %v138 = vld [vmem:[%s1 + $0x3b8] sm:$0xff]
    %v139 = vld [vmem:[%s1 + $0x3c0] sm:$0xff]
    %v140 = vld [vmem:[%s1 + $0x3c8] sm:$0xff]
    %v141 = vld [vmem:[%s1 + $0x3d0] sm:$0xff]
    %v142 = vld [vmem:[%s1 + $0x3d8] sm:$0xff]
    %v143 = vld [vmem:[%s1 + $0x3e0] sm:$0xff]
    %v144 = vld [vmem:[%s1 + $0x3e8] sm:$0xff]
    %v145 = vld [vmem:[%s1 + $0x3f0] sm:$0xff]
    %v146 = vld [vmem:[%s1 + $0x3f8] sm:$0xff]
    %v147 = vld [vmem:[%s1 + $0x400] sm:$0xff]
    %v148 = vld [vmem:[%s1 + $0x408] sm:$0xff]
    %v149 = vld [vmem:[%s1 + $0x410] sm:$0xff]
    %v150 = vld [vmem:[%s1 + $0x418] sm:$0xff]
    %v151 = vld [vmem:[%s1 + $0x420] sm:$0xff]
    %v152 = vld [vmem:[%s1 + $0x428] sm:$0xff]
    %v153 = vld [vmem:[%s1 + $0x430] sm:$0xff]
    %v154 = vld [vmem:[%s1 + $0x438] sm:$0xff]
    %v155 = vld [vmem:[%s1 + $0x440] sm:$0xff]
    %v156 = vld [vmem:[%s1 + $0x448] sm:$0xff]
    %v157 = vld [vmem:[%s1 + $0x450] sm:$0xff]
    %v158 = vld [vmem:[%s1 + $0x458] sm:$0xff]
    %v159 = vld [vmem:[%s1 + $0x460] sm:$0xff]
    %v160 = vld [vmem:[%s1 + $0x468] sm:$0xff]
    %v161 = vld [vmem:[%s1 + $0x470] sm:$0xff]
    %v162 = vld [vmem:[%s1 + $0x478] sm:$0xff]
    %v163 = vld [vmem:[%s1 + $0x480] sm:$0xff]
    %v164 = vld [vmem:[%s1 + $0x488] sm:$0xff]
    %v165 = vld [vmem:[%s1 + $0x490] sm:$0xff]
    %v166 = vld [vmem:[%s1 + $0x498] sm:$0xff]
    %v167 = vld [vmem:[%s1 + $0x4a0] sm:$0xff]
    %v168 = vld [vmem:[%s1 + $0x4a8] sm:$0xff]
    %v169 = vld [vmem:[%s1 + $0x4b0] sm:$0xff]
    %v170 = vld [vmem:[%s1 + $0x4b8] sm:$0xff]
    %v171 = vld [vmem:[%s1 + $0x4c0] sm:$0xff]
    %v172 = vld [vmem:[%s1 + $0x4c8] sm:$0xff]
    %v173 = vld [vmem:[%s1 + $0x4d0] sm:$0xff]
    %v174 = vld [vmem:[%s1 + $0x4d8] sm:$0xff]
    %v175 = vld [vmem:[%s1 + $0x4e0] sm:$0xff]
    %v176 = vld [vmem:[%s1 + $0x4e8] sm:$0xff]
    %v177 = vld [vmem:[%s1 + $0x4f0] sm:$0xff]
    %v178 = vld [vmem:[%s1 + $0x4f8] sm:$0xff]
    %v179 = vld [vmem:[%s1 + $0x500] sm:$0xff]
    %v180 = vld [vmem:[%s1 + $0x508] sm:$0xff]
    %v181 = vld [vmem:[%s1 + $0x510] sm:$0xff]
    %v182 = vld [vmem:[%s1 + $0x518] sm:$0xff]
    %v183 = vld [vmem:[%s1 + $0x520] sm:$0xff]
    %v184 = vld [vmem:[%s1 + $0x528] sm:$0xff]
    %v185 = vld [vmem:[%s1 + $0x530] sm:$0xff]
    %v186 = vld [vmem:[%s1 + $0x538] sm:$0xff]
    %v187 = vld [vmem:[%s1 + $0x540] sm:$0xff]
    %v188 = vld [vmem:[%s1 + $0x548] sm:$0xff]
    %v189 = vld [vmem:[%s1 + $0x550] sm:$0xff]
    %v190 = vld [vmem:[%s1 + $0x558] sm:$0xff]
    %v191 = vld [vmem:[%s1 + $0x560] sm:$0xff]
    %v192 = vld [vmem:[%s1 + $0x568] sm:$0xff]
    %v193 = vld [vmem:[%s1 + $0x570] sm:$0xff]
    %v194 = vld [vmem:[%s1 + $0x578] sm:$0xff]
    %v195 = vld [vmem:[%s1 + $0x580] sm:$0xff]
    %v196 = vld [vmem:[%s1 + $0x588] sm:$0xff]
    %v197 = vld [vmem:[%s1 + $0x590] sm:$0xff]
    %v198 = vld [vmem:[%s1 + $0x598] sm:$0xff]
    %v199 = vld [vmem:[%s1 + $0x5a0] sm:$0xff]
    %v200 = vld [vmem:[%s1 + $0x5a8] sm:$0xff]
    %v201 = vld [vmem:[%s1 + $0x5b0] sm:$0xff]
    %v202 = vld [vmem:[%s1 + $0x5b8] sm:$0xff]
    %v203 = vld [vmem:[%s1 + $0x5c0] sm:$0xff]
    %v204 = vld [vmem:[%s1 + $0x5c8] sm:$0xff]
    %v205 = vld [vmem:[%s1 + $0x5d0] sm:$0xff]
    %v206 = vld [vmem:[%s1 + $0x5d8] sm:$0xff]
    %v207 = vld [vmem:[%s1 + $0x5e0] sm:$0xff]
    %v208 = vld [vmem:[%s1 + $0x5e8] sm:$0xff]
    %v209 = vld [vmem:[%s1 + $0x5f0] sm:$0xff]
    %v210 = vld [vmem:[%s1 + $0x5f8] sm:$0xff]
    %v211 = vld [vmem:[%s1 + $0x600] sm:$0xff]
    %v212 = vld [vmem:[%s1 + $0x608] sm:$0xff]
    %v213 = vld [vmem:[%s1 + $0x610] sm:$0xff]
    %v214 = vld [vmem:[%s1 + $0x618] sm:$0xff]
    %v215 = vld [vmem:[%s2] sm:$0x1]
    %v217 = vperm.slane %v215, 0
    %223 = vst [vmem:[#allocation1] ss:$4 sm:$0xff] %v15
    %s224 = scalar_lea.vmem [#allocation1], 32
    %225 = vst [vmem:[%s224] ss:$4 sm:$0xff] %v16
    %v226 = vld.sshfl [vmem:[#allocation1] sm:$0xff pattern:$0x73625140]
    %v227 = vld.sshfl [vmem:[#allocation1 + $0x8] sm:$0xff pattern:$0x73625140]
    %v228 = vld.sshfl [vmem:[#allocation1 + $0x10] sm:$0xff pattern:$0x73625140]
    %v229 = vld.sshfl [vmem:[#allocation1 + $0x18] sm:$0xff pattern:$0x73625140]
    %v230 = vld.sshfl [vmem:[#allocation1 + $0x20] sm:$0xff pattern:$0x73625140]
    %v231 = vld.sshfl [vmem:[#allocation1 + $0x28] sm:$0xff pattern:$0x73625140]
    %v232 = vld.sshfl [vmem:[#allocation1 + $0x30] sm:$0xff pattern:$0x73625140]
    %v233 = vld.sshfl [vmem:[#allocation1 + $0x38] sm:$0xff pattern:$0x73625140]
    %234 = vst [vmem:[#allocation1] ss:$4 sm:$0xff] %v17
    %235 = vst [vmem:[%s224] ss:$4 sm:$0xff] %v18
    %v236 = vld.sshfl [vmem:[#allocation1] sm:$0xff pattern:$0x73625140]
    %v237 = vld.sshfl [vmem:[#allocation1 + $0x8] sm:$0xff pattern:$0x73625140]
    %v238 = vld.sshfl [vmem:[#allocation1 + $0x10] sm:$0xff pattern:$0x73625140]
    %v239 = vld.sshfl [vmem:[#allocation1 + $0x18] sm:$0xff pattern:$0x73625140]
    %v240 = vld.sshfl [vmem:[#allocation1 + $0x20] sm:$0xff pattern:$0x73625140]
    %vm253 = vcmask 261120
    %v254 = vsel %vm253, %v240, 0
    %256 = vmatpush.msra.mxu0 %v34
    %257 = vmatpush.msra.mxu0 %v33
    %258 = vmatpush.msra.mxu0 %v32
    %259 = vmatpush.msra.mxu0 %v31
    %260 = vmatpush.msra.mxu0 %v30
    %261 = vmatpush.msra.mxu0 %v29
    %262 = vmatpush.msra.mxu0 %v28
    %263 = vmatpush.msra.mxu0 %v27
    %264 = vmatpush.msra.mxu0 %v26
    %265 = vmatpush.msra.mxu0 %v25
    %266 = vmatpush.msra.mxu0 %v24
    %267 = vmatpush.msra.mxu0 %v23
    %268 = vmatpush.msra.mxu0 %v22
    %269 = vmatpush.msra.mxu0 %v21
    %270 = vmatpush.msra.mxu0 %v20
    %271 = vmatpush.msra.mxu0 %v19
    %272 = vmatmul.f32.gmra.mxu0 %v226
    %v273 = vpop.f32.mrf.mxu0
    %v274 = vadd.f32 %v217, %v273
    %275 = vdwg.mxu0
    %276 = vmatpush.msra.mxu0 %v50
    %277 = vmatpush.msra.mxu0 %v49
    %278 = vmatpush.msra.mxu0 %v48
    %279 = vmatpush.msra.mxu0 %v47
    %280 = vmatpush.msra.mxu0 %v46
    %281 = vmatpush.msra.mxu0 %v45
    %282 = vmatpush.msra.mxu0 %v44
    %283 = vmatpush.msra.mxu0 %v43
    %284 = vmatpush.msra.mxu0 %v42
    %285 = vmatpush.msra.mxu0 %v41
    %286 = vmatpush.msra.mxu0 %v40
    %287 = vmatpush.msra.mxu0 %v39
    %288 = vmatpush.msra.mxu0 %v38
    %289 = vmatpush.msra.mxu0 %v37
    %290 = vmatpush.msra.mxu0 %v36
    %291 = vmatpush.msra.mxu0 %v35
    %292 = vmatmul.f32.gmra.mxu0 %v227
    %v293 = vpop.f32.mrf.mxu0
    %v294 = vadd.f32 %v274, %v293
    %295 = vdwg.mxu0
    %296 = vmatpush.msra.mxu0 %v66
    %297 = vmatpush.msra.mxu0 %v65
    %298 = vmatpush.msra.mxu0 %v64
    %299 = vmatpush.msra.mxu0 %v63
    %300 = vmatpush.msra.mxu0 %v62
    %301 = vmatpush.msra.mxu0 %v61
    %302 = vmatpush.msra.mxu0 %v60
    %303 = vmatpush.msra.mxu0 %v59
    %304 = vmatpush.msra.mxu0 %v58
    %305 = vmatpush.msra.mxu0 %v57
    %306 = vmatpush.msra.mxu0 %v56
    %307 = vmatpush.msra.mxu0 %v55
    %308 = vmatpush.msra.mxu0 %v54
    %309 = vmatpush.msra.mxu0 %v53
    %310 = vmatpush.msra.mxu0 %v52
    %311 = vmatpush.msra.mxu0 %v51
    %312 = vmatmul.f32.gmra.mxu0 %v228
    %v313 = vpop.f32.mrf.mxu0
    %v314 = vadd.f32 %v294, %v313
    %315 = vdwg.mxu0
    %316 = vmatpush.msra.mxu0 %v82
    %317 = vmatpush.msra.mxu0 %v81
    %318 = vmatpush.msra.mxu0 %v80
    %319 = vmatpush.msra.mxu0 %v79
    %320 = vmatpush.msra.mxu0 %v78
    %321 = vmatpush.msra.mxu0 %v77
    %322 = vmatpush.msra.mxu0 %v76
    %323 = vmatpush.msra.mxu0 %v75
    %324 = vmatpush.msra.mxu0 %v74
    %325 = vmatpush.msra.mxu0 %v73
    %326 = vmatpush.msra.mxu0 %v72
    %327 = vmatpush.msra.mxu0 %v71
    %328 = vmatpush.msra.mxu0 %v70
    %329 = vmatpush.msra.mxu0 %v69
    %330 = vmatpush.msra.mxu0 %v68
    %331 = vmatpush.msra.mxu0 %v67
    %332 = vmatmul.f32.gmra.mxu0 %v229
    %v333 = vpop.f32.mrf.mxu0
    %v334 = vadd.f32 %v314, %v333
    %335 = vdwg.mxu0
    %336 = vmatpush.msra.mxu0 %v98
    %337 = vmatpush.msra.mxu0 %v97
    %338 = vmatpush.msra.mxu0 %v96
    %339 = vmatpush.msra.mxu0 %v95
    %340 = vmatpush.msra.mxu0 %v94
    %341 = vmatpush.msra.mxu0 %v93
    %342 = vmatpush.msra.mxu0 %v92
    %343 = vmatpush.msra.mxu0 %v91
    %344 = vmatpush.msra.mxu0 %v90
    %345 = vmatpush.msra.mxu0 %v89
    %346 = vmatpush.msra.mxu0 %v88
    %347 = vmatpush.msra.mxu0 %v87
    %348 = vmatpush.msra.mxu0 %v86
    %349 = vmatpush.msra.mxu0 %v85
    %350 = vmatpush.msra.mxu0 %v84
    %351 = vmatpush.msra.mxu0 %v83
    %352 = vmatmul.f32.gmra.mxu0 %v230
    %v353 = vpop.f32.mrf.mxu0
    %v354 = vadd.f32 %v334, %v353
    %355 = vdwg.mxu0
    %356 = vmatpush.msra.mxu0 %v114
    %357 = vmatpush.msra.mxu0 %v113
    %358 = vmatpush.msra.mxu0 %v112
    %359 = vmatpush.msra.mxu0 %v111
    %360 = vmatpush.msra.mxu0 %v110
    %361 = vmatpush.msra.mxu0 %v109
    %362 = vmatpush.msra.mxu0 %v108
    %363 = vmatpush.msra.mxu0 %v107
    %364 = vmatpush.msra.mxu0 %v106
    %365 = vmatpush.msra.mxu0 %v105
    %366 = vmatpush.msra.mxu0 %v104
    %367 = vmatpush.msra.mxu0 %v103
    %368 = vmatpush.msra.mxu0 %v102
    %369 = vmatpush.msra.mxu0 %v101
    %370 = vmatpush.msra.mxu0 %v100
    %371 = vmatpush.msra.mxu0 %v99
    %372 = vmatmul.f32.gmra.mxu0 %v231
    %v373 = vpop.f32.mrf.mxu0
    %v374 = vadd.f32 %v354, %v373
    %375 = vdwg.mxu0
    %376 = vmatpush.msra.mxu0 %v130
    %377 = vmatpush.msra.mxu0 %v129
    %378 = vmatpush.msra.mxu0 %v128
    %379 = vmatpush.msra.mxu0 %v127
    %380 = vmatpush.msra.mxu0 %v126
    %381 = vmatpush.msra.mxu0 %v125
    %382 = vmatpush.msra.mxu0 %v124
    %383 = vmatpush.msra.mxu0 %v123
    %384 = vmatpush.msra.mxu0 %v122
    %385 = vmatpush.msra.mxu0 %v121
    %386 = vmatpush.msra.mxu0 %v120
    %387 = vmatpush.msra.mxu0 %v119
    %388 = vmatpush.msra.mxu0 %v118
    %389 = vmatpush.msra.mxu0 %v117
    %390 = vmatpush.msra.mxu0 %v116
    %391 = vmatpush.msra.mxu0 %v115
    %392 = vmatmul.f32.gmra.mxu0 %v232
    %v393 = vpop.f32.mrf.mxu0
    %v394 = vadd.f32 %v374, %v393
    %395 = vdwg.mxu0
    %396 = vmatpush.msra.mxu0 %v146
    %397 = vmatpush.msra.mxu0 %v145
    %398 = vmatpush.msra.mxu0 %v144
    %399 = vmatpush.msra.mxu0 %v143
    %400 = vmatpush.msra.mxu0 %v142
    %401 = vmatpush.msra.mxu0 %v141
    %402 = vmatpush.msra.mxu0 %v140
    %403 = vmatpush.msra.mxu0 %v139
    %404 = vmatpush.msra.mxu0 %v138
    %405 = vmatpush.msra.mxu0 %v137
    %406 = vmatpush.msra.mxu0 %v136
    %407 = vmatpush.msra.mxu0 %v135
    %408 = vmatpush.msra.mxu0 %v134
    %409 = vmatpush.msra.mxu0 %v133
    %410 = vmatpush.msra.mxu0 %v132
    %411 = vmatpush.msra.mxu0 %v131
    %412 = vmatmul.f32.gmra.mxu0 %v233
    %v413 = vpop.f32.mrf.mxu0
    %v414 = vadd.f32 %v394, %v413
    %415 = vdwg.mxu0
    %416 = vmatpush.msra.mxu0 %v162
    %417 = vmatpush.msra.mxu0 %v161
    %418 = vmatpush.msra.mxu0 %v160
    %419 = vmatpush.msra.mxu0 %v159
    %420 = vmatpush.msra.mxu0 %v158
    %421 = vmatpush.msra.mxu0 %v157
    %422 = vmatpush.msra.mxu0 %v156
    %423 = vmatpush.msra.mxu0 %v155
    %424 = vmatpush.msra.mxu0 %v154
    %425 = vmatpush.msra.mxu0 %v153
    %426 = vmatpush.msra.mxu0 %v152
    %427 = vmatpush.msra.mxu0 %v151
    %428 = vmatpush.msra.mxu0 %v150
    %429 = vmatpush.msra.mxu0 %v149
    %430 = vmatpush.msra.mxu0 %v148
    %431 = vmatpush.msra.mxu0 %v147
    %432 = vmatmul.f32.gmra.mxu0 %v236
    %v433 = vpop.f32.mrf.mxu0
    %v434 = vadd.f32 %v414, %v433
    %435 = vdwg.mxu0
    %436 = vmatpush.msra.mxu0 %v178
    %437 = vmatpush.msra.mxu0 %v177
    %438 = vmatpush.msra.mxu0 %v176
    %439 = vmatpush.msra.mxu0 %v175
    %440 = vmatpush.msra.mxu0 %v174
    %441 = vmatpush.msra.mxu0 %v173
    %442 = vmatpush.msra.mxu0 %v172
    %443 = vmatpush.msra.mxu0 %v171
    %444 = vmatpush.msra.mxu0 %v170
    %445 = vmatpush.msra.mxu0 %v169
    %446 = vmatpush.msra.mxu0 %v168
    %447 = vmatpush.msra.mxu0 %v167
    %448 = vmatpush.msra.mxu0 %v166
    %449 = vmatpush.msra.mxu0 %v165
    %450 = vmatpush.msra.mxu0 %v164
    %451 = vmatpush.msra.mxu0 %v163
    %452 = vmatmul.f32.gmra.mxu0 %v237
    %v453 = vpop.f32.mrf.mxu0
    %v454 = vadd.f32 %v434, %v453
    %455 = vdwg.mxu0
    %456 = vmatpush.msra.mxu0 %v194
    %457 = vmatpush.msra.mxu0 %v193
    %458 = vmatpush.msra.mxu0 %v192
    %459 = vmatpush.msra.mxu0 %v191
    %460 = vmatpush.msra.mxu0 %v190
    %461 = vmatpush.msra.mxu0 %v189
    %462 = vmatpush.msra.mxu0 %v188
    %463 = vmatpush.msra.mxu0 %v187
    %464 = vmatpush.msra.mxu0 %v186
    %465 = vmatpush.msra.mxu0 %v185
    %466 = vmatpush.msra.mxu0 %v184
    %467 = vmatpush.msra.mxu0 %v183
    %468 = vmatpush.msra.mxu0 %v182
    %469 = vmatpush.msra.mxu0 %v181
    %470 = vmatpush.msra.mxu0 %v180
    %471 = vmatpush.msra.mxu0 %v179
    %472 = vmatmul.f32.gmra.mxu0 %v238
    %v473 = vpop.f32.mrf.mxu0
    %v474 = vadd.f32 %v454, %v473
    %475 = vdwg.mxu0
    %476 = vmatpush.msra.mxu0 %v210
    %477 = vmatpush.msra.mxu0 %v209
    %478 = vmatpush.msra.mxu0 %v208
    %479 = vmatpush.msra.mxu0 %v207
    %480 = vmatpush.msra.mxu0 %v206
    %481 = vmatpush.msra.mxu0 %v205
    %482 = vmatpush.msra.mxu0 %v204
    %483 = vmatpush.msra.mxu0 %v203
    %484 = vmatpush.msra.mxu0 %v202
    %485 = vmatpush.msra.mxu0 %v201
    %486 = vmatpush.msra.mxu0 %v200
    %487 = vmatpush.msra.mxu0 %v199
    %488 = vmatpush.msra.mxu0 %v198
    %489 = vmatpush.msra.mxu0 %v197
    %490 = vmatpush.msra.mxu0 %v196
    %491 = vmatpush.msra.mxu0 %v195
    %492 = vmatmul.f32.gmra.mxu0 %v239
    %v493 = vpop.f32.mrf.mxu0
    %v494 = vadd.f32 %v474, %v493
    %495 = vdwg.mxu0
    %496 = vmatpush.msra.mxu0 0.0
    %497 = vmatpush.msra.mxu0 0.0
    %498 = vmatpush.msra.mxu0 0.0
    %499 = vmatpush.msra.mxu0 0.0
    %500 = vmatpush.msra.mxu0 0.0
    %501 = vmatpush.msra.mxu0 0.0
    %502 = vmatpush.msra.mxu0 0.0
    %503 = vmatpush.msra.mxu0 0.0
    %504 = vmatpush.msra.mxu0 0.0
    %505 = vmatpush.msra.mxu0 0.0
    %506 = vmatpush.msra.mxu0 0.0
    %507 = vmatpush.msra.mxu0 0.0
    %508 = vmatpush.msra.mxu0 %v214
    %509 = vmatpush.msra.mxu0 %v213
    %510 = vmatpush.msra.mxu0 %v212
    %511 = vmatpush.msra.mxu0 %v211
    %512 = vmatmul.f32.gmra.mxu0 %v254
    %v513 = vpop.f32.mrf.mxu0
    %v514 = vadd.f32 %v494, %v513
    %515 = vdwg.mxu0
    %vm516 = vcmask 74752
    %517 = vst.msk [vmem:[#allocation2] sm:$0x3] %vm516, %v514
    // Predicated region
    $region14: #{cnn_forward.5} parent=1 // pred_check
      _
    $region15: #{cnn_forward.5} parent=1 // pred_check_branch
      %519 = sbr.rel (0) target = $region17
    $region16: #{cnn_forward.5} parent=1 // pred_region
      %521 = vsyncadd [#allocation3], 0
      %s523 = sshll.u32 [#allocation2], 4
      %s524 = int_to_ptr.vmem [resolvable:$true] %s523
      %s525 = sshll.u32 %s3, 4
      %s526 = int_to_ptr.hbm [resolvable:$true] %s525
      %528 = dma.vmem_to_hbm [thread:$0]  %s524, 32, %s526, [#allocation3]
    $region17: #{cnn_forward.5} parent=1 // pred_fallthru
      _
    // Predicated region
    $region18: #{cnn_forward.5} parent=1 // pred_check
      _
    $region19: #{cnn_forward.5} parent=1 // pred_check_branch
      %530 = sbr.rel (0) target = $region21
    $region20: #{cnn_forward.5} parent=1 // pred_region
      %532 = dma.done [#allocation3], 32
    $region21: #{cnn_forward.5} parent=1 // pred_fallthru
      _
    %533 = vsyncpa [#allocation3], 1

</llo_original>
